<compile_context>
chip_gen: v7x
topology: tpu7x:2x2x1
jax: 0.10.0
libtpu: 0.0.40
codegen_flags: <defaults>
</compile_context>

<pallas_src>
import functools

import jax
import jax.numpy as jnp
from jax.experimental import pallas as pl
from jax.experimental.pallas import tpu as pltpu


GROUPS = 4          # hard-coded in the PyTorch module (groups=4 convs)
BN_EPS = 1e-5       # nn.BatchNorm1d/2d default


# --------------------------------------------------------------------------- #
# Fused gate kernel: one grid step == one batch element
# --------------------------------------------------------------------------- #
def _gate_kernel(x_ref, wseq_ref, bseq_ref, wedge_ref, bedge_ref,
                 mask_l_ref, mask_r_ref, wout_seq_ref, wout_edge_ref, bout_ref,
                 o_ref, *, W):
    f32 = jnp.float32
    x = x_ref[0]                                    # (C, L): channels on sublanes, tokens on lanes
    C, L = x.shape
    inv_L = f32(1.0 / L)

    def shift(v, s):
        # shifted[:, t] = v[:, t + s], zero outside [0, L)  (static s, lane-axis)
        if s == 0:
            return v
        if s > 0:
            return jnp.concatenate([v[:, s:], jnp.zeros((C, s), f32)], axis=1)
        return jnp.concatenate([jnp.zeros((C, -s), f32), v[:, :L + s]], axis=1)

    # ---- sequence branch: Conv1d(k=3, pad=1); groups + eval-BN folded into weights
    seq = jnp.dot(wseq_ref[0], shift(x, -1), preferred_element_type=f32)
    seq = seq + jnp.dot(wseq_ref[1], x, preferred_element_type=f32)
    seq = seq + jnp.dot(wseq_ref[2], shift(x, 1), preferred_element_type=f32)
    seq = jnp.maximum(seq + bseq_ref[...], 0.0)                       # (rd, L)  ReLU

    # ---- edge branch: Conv2d(3x3, pad=1) on the HxW grid flattened along lanes.
    # Row-boundary zeros come from the flat shift's zero fill; column-boundary
    # zeros come from the precomputed 0/1 masks (valid-left / valid-right).
    mask_l = mask_l_ref[...]                                          # (1, L)
    mask_r = mask_r_ref[...]                                          # (1, L)
    ed = wedge_ref.shape[1]
    acc = jnp.zeros((ed, L), f32)
    tap = 0
    for di in (-1, 0, 1):
        for dj in (-1, 0, 1):
            xs = shift(x, di * W + dj)
            if dj == -1:
                xs = xs * mask_l
            elif dj == 1:
                xs = xs * mask_r
            acc = acc + jnp.dot(wedge_ref[tap], xs, preferred_element_type=f32)
            tap += 1
    edge = jnp.maximum(acc + bedge_ref[...], 0.0)                     # (ed, L)  ReLU

    # ---- adaptive average pool as a lane-contraction matmul -> row layout,
    #      gate linear (clamped temperature pre-folded), softmax.
    ones_row = jnp.ones((1, L), f32)
    contract = (((1,), (1,)), ((), ()))
    pooled_seq = jax.lax.dot_general(ones_row, seq, contract,
                                     preferred_element_type=f32) * inv_L     # (1, rd)
    pooled_edge = jax.lax.dot_general(ones_row, edge, contract,
                                      preferred_element_type=f32) * inv_L    # (1, ed)
    logits = (jnp.dot(pooled_seq, wout_seq_ref[...], preferred_element_type=f32)
              + jnp.dot(pooled_edge, wout_edge_ref[...], preferred_element_type=f32)
              + bout_ref[...])                                        # (1, E)
    m = jnp.max(logits, axis=-1, keepdims=True)
    e = jnp.exp(logits - m)
    o_ref[0] = e / jnp.sum(e, axis=-1, keepdims=True)


# --------------------------------------------------------------------------- #
# Parameter preprocessing (tiny, fused by XLA under jit)
# --------------------------------------------------------------------------- #
def _expand_grouped(w, groups):
    """Grouped conv weight (Cout, Cin/g, *k) -> dense block-diagonal (Cout, Cin, *k)."""
    cout, cig = w.shape[0], w.shape[1]
    cog = cout // groups
    dense = jnp.zeros((cout, cig * groups) + w.shape[2:], w.dtype)
    for g in range(groups):
        dense = dense.at[g * cog:(g + 1) * cog, g * cig:(g + 1) * cig].set(
            w[g * cog:(g + 1) * cog])
    return dense


def _fold_bn(w_dense, b, bn, eps):
    """Fold eval-mode BatchNorm (running stats) into conv weight/bias."""
    scale = bn["w"] * jax.lax.rsqrt(bn["rv"] + eps)
    w_f = w_dense * scale.reshape((-1,) + (1,) * (w_dense.ndim - 1))
    b_f = (b - bn["rm"]) * scale + bn["b"]
    return w_f, b_f


# --------------------------------------------------------------------------- #
# LightweightHybridGate.forward  (eval mode)
# --------------------------------------------------------------------------- #
def lightweight_hybrid_gate_forward(params, x):
    """x: (B, C, H, W) -> (weights (B, num_experts), balance_loss)."""
    B, C, H, W = x.shape
    L = H * W
    E = params["out_w"].shape[0]
    rd = params["seq_conv_w"].shape[0]
    ed = params["edge_conv_w"].shape[0]

    # Fold groups + eval BN into dense per-tap weights.
    w_seq = _expand_grouped(params["seq_conv_w"], GROUPS)             # (rd, C, 3)
    w_edge = _expand_grouped(params["edge_conv_w"], GROUPS)           # (ed, C, 3, 3)
    w_seq, b_seq = _fold_bn(w_seq, params["seq_conv_b"], params["seq_bn"], BN_EPS)
    w_edge, b_edge = _fold_bn(w_edge, params["edge_conv_b"], params["edge_bn"], BN_EPS)
    wseq_taps = jnp.transpose(w_seq, (2, 0, 1))                       # (3, rd, C)
    wedge_taps = jnp.transpose(w_edge, (2, 3, 0, 1)).reshape(9, ed, C)
    bseq = b_seq.reshape(rd, 1)
    bedge = b_edge.reshape(ed, 1)

    # Fold the clamped temperature into the gate linear.
    temp = jnp.maximum(params["temperature"], 0.1)                    # .clamp(min=0.1)
    wout = params["out_w"].T / temp                                   # (F, E)
    bout = (params["out_b"] / temp).reshape(1, E)
    wout_seq, wout_edge = wout[:rd], wout[rd:]

    # Column-boundary validity masks for the 3x3 conv (0/1 in f32).
    col = jnp.arange(L, dtype=jnp.int32) % W
    mask_l = (col >= 1).astype(jnp.float32).reshape(1, L)
    mask_r = (col <= W - 2).astype(jnp.float32).reshape(1, L)

    x_seq = x.reshape(B, C, L).astype(jnp.float32)                    # NCHW -> (B, C, HW), free

    weights = pl.pallas_call(
        functools.partial(_gate_kernel, W=W),
        out_shape=jax.ShapeDtypeStruct((B, 1, E), jnp.float32),
        grid=(B,),
        in_specs=[
            pl.BlockSpec((1, C, L), lambda i: (i, 0, 0)),
            pl.BlockSpec((3, rd, C), lambda i: (0, 0, 0)),
            pl.BlockSpec((rd, 1), lambda i: (0, 0)),
            pl.BlockSpec((9, ed, C), lambda i: (0, 0, 0)),
            pl.BlockSpec((ed, 1), lambda i: (0, 0)),
            pl.BlockSpec((1, L), lambda i: (0, 0)),
            pl.BlockSpec((1, L), lambda i: (0, 0)),
            pl.BlockSpec((rd, E), lambda i: (0, 0)),
            pl.BlockSpec((ed, E), lambda i: (0, 0)),
            pl.BlockSpec((1, E), lambda i: (0, 0)),
        ],
        out_specs=pl.BlockSpec((1, 1, E), lambda i: (i, 0, 0)),
        compiler_params=pltpu.CompilerParams(dimension_semantics=("parallel",)),
    )(x_seq, wseq_taps, bseq, wedge_taps, bedge, mask_l, mask_r,
      wout_seq, wout_edge, bout)

    # TODO(synk): training-mode balance_loss (load/importance statistics) is
    #             host-side bookkeeping; eval-mode returns 0 as in the reference.
    balance_loss = jnp.float32(0.0)
    return weights.reshape(B, E), balance_loss


# --------------------------------------------------------------------------- #
# Pure-JAX reference (faithful to the PyTorch ops) for self-checking
# --------------------------------------------------------------------------- #
def _reference_gate(p, x):
    hp = jax.lax.Precision.HIGHEST
    B, C, H, W = x.shape
    L = H * W
    rd = p["seq_conv_w"].shape[0]
    ed = p["edge_conv_w"].shape[0]
    cig = C // GROUPS

    # Conv1d(k=3, pad=1, groups)
    xs = x.reshape(B, C, L)
    xp = jnp.pad(xs, ((0, 0), (0, 0), (1, 1)))
    cog = rd // GROUPS
    seq = jnp.zeros((B, rd, L), jnp.float32)
    for g in range(GROUPS):
        xg = xp[:, g * cig:(g + 1) * cig]
        wg = p["seq_conv_w"][g * cog:(g + 1) * cog]
        acc = jnp.zeros((B, cog, L), jnp.float32)
        for k in range(3):
            acc = acc + jnp.einsum("bcl,oc->bol", xg[:, :, k:k + L], wg[:, :, k],
                                   precision=hp)
        seq = seq.at[:, g * cog:(g + 1) * cog].set(acc)
    seq = seq + p["seq_conv_b"][None, :, None]
    bn = p["seq_bn"]
    seq = ((seq - bn["rm"][None, :, None])
           * jax.lax.rsqrt(bn["rv"][None, :, None] + BN_EPS)
           * bn["w"][None, :, None] + bn["b"][None, :, None])
    seq = jnp.maximum(seq, 0.0)
    seq_feat = jnp.mean(seq, axis=2)

    # Conv2d(3x3, pad=1, groups)
    xp2 = jnp.pad(x, ((0, 0), (0, 0), (1, 1), (1, 1)))
    cog2 = ed // GROUPS
    edge = jnp.zeros((B, ed, H, W), jnp.float32)
    for g in range(GROUPS):
        xg = xp2[:, g * cig:(g + 1) * cig]
        wg = p["edge_conv_w"][g * cog2:(g + 1) * cog2]
        acc = jnp.zeros((B, cog2, H, W), jnp.float32)
        for ki in range(3):
            for kj in range(3):
                acc = acc + jnp.einsum("bchw,oc->bohw",
                                       xg[:, :, ki:ki + H, kj:kj + W],
                                       wg[:, :, ki, kj], precision=hp)
        edge = edge.at[:, g * cog2:(g + 1) * cog2].set(acc)
    edge = edge + p["edge_conv_b"][None, :, None, None]
    bn = p["edge_bn"]
    edge = ((edge - bn["rm"][None, :, None, None])
            * jax.lax.rsqrt(bn["rv"][None, :, None, None] + BN_EPS)
            * bn["w"][None, :, None, None] + bn["b"][None, :, None, None])
    edge = jnp.maximum(edge, 0.0)
    edge_feat = jnp.mean(edge, axis=(2, 3))

    combined = jnp.concatenate([seq_feat, edge_feat], axis=1)
    logits = jnp.dot(combined, p["out_w"].T, precision=hp) + p["out_b"]
    t = jnp.maximum(p["temperature"], 0.1)
    return jax.nn.softmax(logits / t, axis=-1)


# --------------------------------------------------------------------------- #
# Deterministic synthetic parameters (shapes follow the module __init__)
# --------------------------------------------------------------------------- #
def init_params(key, dim, num_experts=3, reduction_ratio=16):
    rd = max(4, dim // reduction_ratio)
    ed = max(4, dim // 16)
    ks = iter(jax.random.split(key, 16))

    def nrm(shape, s=0.1):
        return s * jax.random.normal(next(ks), shape, jnp.float32)

    def bn(c):
        k1, k2, k3, k4 = jax.random.split(next(ks), 4)
        return dict(w=1.0 + 0.1 * jax.random.normal(k1, (c,), jnp.float32),
                    b=0.1 * jax.random.normal(k2, (c,), jnp.float32),
                    rm=0.1 * jax.random.normal(k3, (c,), jnp.float32),
                    rv=0.5 + jax.random.uniform(k4, (c,), jnp.float32))

    return dict(
        seq_conv_w=nrm((rd, dim // GROUPS, 3)),
        seq_conv_b=nrm((rd,)),
        seq_bn=bn(rd),
        edge_conv_w=nrm((ed, dim // GROUPS, 3, 3)),
        edge_conv_b=nrm((ed,)),
        edge_bn=bn(ed),
        out_w=nrm((num_experts, rd + ed), 0.5),
        out_b=nrm((num_experts,), 0.5),
        temperature=jnp.float32(0.5),
    )


# --------------------------------------------------------------------------- #
if __name__ == "__main__":
    B, dim, H, W = 2, 32, 16, 16
    num_experts = 3

    root = jax.random.PRNGKey(0)
    kx, kp = jax.random.split(root)
    x = jax.random.normal(kx, (B, dim, H, W), jnp.float32)
    params = init_params(kp, dim, num_experts)

    fwd = jax.jit(lightweight_hybrid_gate_forward)
    weights, balance_loss = fwd(params, x)
    weights = jax.block_until_ready(weights)

    w_ref = _reference_gate(params, x)

    assert weights.shape == (B, num_experts)
    assert bool(jnp.all(jnp.isfinite(weights)))
    assert bool(jnp.allclose(jnp.sum(weights, axis=-1), 1.0, atol=1e-4))
    assert bool(jnp.allclose(weights, w_ref, atol=2e-3, rtol=2e-3))
    assert float(balance_loss) == 0.0
    print("KERNEL_OK")
</pallas_src>

<mosaic_0001>
module attributes {stable_mosaic.version = 11 : i64} {
  func.func @_gate_kernel(%arg0: i32, %arg1: memref<1x32x256xf32, #tpu.memory_space<vmem>>, %arg2: memref<3x4x32xf32, #tpu.memory_space<vmem>>, %arg3: memref<4x1xf32, #tpu.memory_space<vmem>>, %arg4: memref<9x4x32xf32, #tpu.memory_space<vmem>>, %arg5: memref<4x1xf32, #tpu.memory_space<vmem>>, %arg6: memref<1x256xf32, #tpu.memory_space<vmem>>, %arg7: memref<1x256xf32, #tpu.memory_space<vmem>>, %arg8: memref<4x3xf32, #tpu.memory_space<vmem>>, %arg9: memref<4x3xf32, #tpu.memory_space<vmem>>, %arg10: memref<1x3xf32, #tpu.memory_space<vmem>>, %arg11: memref<1x1x3xf32, #tpu.memory_space<vmem>>) attributes {dimension_semantics = [#tpu.dimension_semantics<parallel>], iteration_bounds = array<i64: 2>, scalar_prefetch = 0 : i64, scratch_operands = 0 : i64, tpu.core_type = #tpu.core_type<tc>, window_params = [{transform_indices = @transform_0, window_bounds = array<i64: 1, 32, 256>}, {pipeline_mode = #tpu.pipeline_mode<synchronous>, transform_indices = @transform_1, window_bounds = array<i64: 3, 4, 32>}, {pipeline_mode = #tpu.pipeline_mode<synchronous>, transform_indices = @transform_2, window_bounds = array<i64: 4, 1>}, {pipeline_mode = #tpu.pipeline_mode<synchronous>, transform_indices = @transform_3, window_bounds = array<i64: 9, 4, 32>}, {pipeline_mode = #tpu.pipeline_mode<synchronous>, transform_indices = @transform_4, window_bounds = array<i64: 4, 1>}, {pipeline_mode = #tpu.pipeline_mode<synchronous>, transform_indices = @transform_5, window_bounds = array<i64: 1, 256>}, {pipeline_mode = #tpu.pipeline_mode<synchronous>, transform_indices = @transform_6, window_bounds = array<i64: 1, 256>}, {pipeline_mode = #tpu.pipeline_mode<synchronous>, transform_indices = @transform_7, window_bounds = array<i64: 4, 3>}, {pipeline_mode = #tpu.pipeline_mode<synchronous>, transform_indices = @transform_8, window_bounds = array<i64: 4, 3>}, {pipeline_mode = #tpu.pipeline_mode<synchronous>, transform_indices = @transform_9, window_bounds = array<i64: 1, 3>}, {transform_indices = @transform_10, window_bounds = array<i64: 1, 1, 3>}]} {
    %c0 = arith.constant 0 : index
    %c0_0 = arith.constant 0 : index
    %c0_1 = arith.constant 0 : index
    %0 = vector.load %arg1[%c0, %c0_0, %c0_1] : memref<1x32x256xf32, #tpu.memory_space<vmem>>, vector<1x32x256xf32>
    %1 = vector.shape_cast %0 : vector<1x32x256xf32> to vector<32x256xf32>
    %c0_2 = arith.constant 0 : index
    %c0_3 = arith.constant 0 : index
    %c0_4 = arith.constant 0 : index
    %2 = vector.load %arg2[%c0_2, %c0_3, %c0_4] : memref<3x4x32xf32, #tpu.memory_space<vmem>>, vector<1x4x32xf32>
    %3 = vector.shape_cast %2 : vector<1x4x32xf32> to vector<4x32xf32>
    %cst = arith.constant 0.000000e+00 : f32
    %4 = vector.broadcast %cst : f32 to vector<32x1xf32>
    %5 = vector.extract_strided_slice %1 {offsets = [0, 0], sizes = [32, 255], strides = [1, 1]} : vector<32x256xf32> to vector<32x255xf32>
    %6 = tpu.concatenate %4, %5 in 1 : vector<32x1xf32>, vector<32x255xf32> -> vector<32x256xf32>
    %cst_5 = arith.constant dense<0.000000e+00> : vector<4x256xf32>
    %7 = tpu.matmul %3, %6, %cst_5 {dimension_numbers = #tpu.dot_dimension_numbers<[1], [0], [0], [1], [0, 0, 1, 1], [], []>} : vector<4x32xf32>, vector<32x256xf32>, vector<4x256xf32> -> vector<4x256xf32>
    %c1 = arith.constant 1 : index
    %c0_6 = arith.constant 0 : index
    %c0_7 = arith.constant 0 : index
    %8 = vector.load %arg2[%c1, %c0_6, %c0_7] : memref<3x4x32xf32, #tpu.memory_space<vmem>>, vector<1x4x32xf32>
    %9 = vector.shape_cast %8 : vector<1x4x32xf32> to vector<4x32xf32>
    %cst_8 = arith.constant dense<0.000000e+00> : vector<4x256xf32>
    %10 = tpu.matmul %9, %1, %cst_8 {dimension_numbers = #tpu.dot_dimension_numbers<[1], [0], [0], [1], [0, 0, 1, 1], [], []>} : vector<4x32xf32>, vector<32x256xf32>, vector<4x256xf32> -> vector<4x256xf32>
    %11 = arith.addf %7, %10 : vector<4x256xf32>
    %c2 = arith.constant 2 : index
    %c0_9 = arith.constant 0 : index
    %c0_10 = arith.constant 0 : index
    %12 = vector.load %arg2[%c2, %c0_9, %c0_10] : memref<3x4x32xf32, #tpu.memory_space<vmem>>, vector<1x4x32xf32>
    %13 = vector.shape_cast %12 : vector<1x4x32xf32> to vector<4x32xf32>
    %14 = vector.extract_strided_slice %1 {offsets = [0, 1], sizes = [32, 255], strides = [1, 1]} : vector<32x256xf32> to vector<32x255xf32>
    %cst_11 = arith.constant 0.000000e+00 : f32
    %15 = vector.broadcast %cst_11 : f32 to vector<32x1xf32>
    %16 = tpu.concatenate %14, %15 in 1 : vector<32x255xf32>, vector<32x1xf32> -> vector<32x256xf32>
    %cst_12 = arith.constant dense<0.000000e+00> : vector<4x256xf32>
    %17 = tpu.matmul %13, %16, %cst_12 {dimension_numbers = #tpu.dot_dimension_numbers<[1], [0], [0], [1], [0, 0, 1, 1], [], []>} : vector<4x32xf32>, vector<32x256xf32>, vector<4x256xf32> -> vector<4x256xf32>
    %18 = arith.addf %11, %17 : vector<4x256xf32>
    %c0_13 = arith.constant 0 : index
    %c0_14 = arith.constant 0 : index
    %19 = vector.load %arg3[%c0_13, %c0_14] : memref<4x1xf32, #tpu.memory_space<vmem>>, vector<4x1xf32>
    %20 = vector.broadcast %19 : vector<4x1xf32> to vector<4x256xf32>
    %21 = arith.addf %18, %20 : vector<4x256xf32>
    %cst_15 = arith.constant 0.000000e+00 : f32
    %22 = vector.broadcast %cst_15 : f32 to vector<4x256xf32>
    %23 = arith.maximumf %21, %22 : vector<4x256xf32>
    %c0_16 = arith.constant 0 : index
    %c0_17 = arith.constant 0 : index
    %24 = vector.load %arg6[%c0_16, %c0_17] : memref<1x256xf32, #tpu.memory_space<vmem>>, vector<1x256xf32>
    %c0_18 = arith.constant 0 : index
    %c0_19 = arith.constant 0 : index
    %25 = vector.load %arg7[%c0_18, %c0_19] : memref<1x256xf32, #tpu.memory_space<vmem>>, vector<1x256xf32>
    %cst_20 = arith.constant 0.000000e+00 : f32
    %26 = vector.broadcast %cst_20 : f32 to vector<4x256xf32>
    %cst_21 = arith.constant 0.000000e+00 : f32
    %27 = vector.broadcast %cst_21 : f32 to vector<32x17xf32>
    %28 = vector.extract_strided_slice %1 {offsets = [0, 0], sizes = [32, 239], strides = [1, 1]} : vector<32x256xf32> to vector<32x239xf32>
    %29 = tpu.concatenate %27, %28 in 1 : vector<32x17xf32>, vector<32x239xf32> -> vector<32x256xf32>
    %30 = vector.broadcast %24 : vector<1x256xf32> to vector<32x256xf32>
    %31 = arith.mulf %29, %30 : vector<32x256xf32>
    %c0_22 = arith.constant 0 : index
    %c0_23 = arith.constant 0 : index
    %c0_24 = arith.constant 0 : index
    %32 = vector.load %arg4[%c0_22, %c0_23, %c0_24] : memref<9x4x32xf32, #tpu.memory_space<vmem>>, vector<1x4x32xf32>
    %33 = vector.shape_cast %32 : vector<1x4x32xf32> to vector<4x32xf32>
    %cst_25 = arith.constant dense<0.000000e+00> : vector<4x256xf32>
    %34 = tpu.matmul %33, %31, %cst_25 {dimension_numbers = #tpu.dot_dimension_numbers<[1], [0], [0], [1], [0, 0, 1, 1], [], []>} : vector<4x32xf32>, vector<32x256xf32>, vector<4x256xf32> -> vector<4x256xf32>
    %35 = arith.addf %26, %34 : vector<4x256xf32>
    %cst_26 = arith.constant 0.000000e+00 : f32
    %36 = vector.broadcast %cst_26 : f32 to vector<32x16xf32>
    %37 = vector.extract_strided_slice %1 {offsets = [0, 0], sizes = [32, 240], strides = [1, 1]} : vector<32x256xf32> to vector<32x240xf32>
    %38 = tpu.concatenate %36, %37 in 1 : vector<32x16xf32>, vector<32x240xf32> -> vector<32x256xf32>
    %c1_27 = arith.constant 1 : index
    %c0_28 = arith.constant 0 : index
    %c0_29 = arith.constant 0 : index
    %39 = vector.load %arg4[%c1_27, %c0_28, %c0_29] : memref<9x4x32xf32, #tpu.memory_space<vmem>>, vector<1x4x32xf32>
    %40 = vector.shape_cast %39 : vector<1x4x32xf32> to vector<4x32xf32>
    %cst_30 = arith.constant dense<0.000000e+00> : vector<4x256xf32>
    %41 = tpu.matmul %40, %38, %cst_30 {dimension_numbers = #tpu.dot_dimension_numbers<[1], [0], [0], [1], [0, 0, 1, 1], [], []>} : vector<4x32xf32>, vector<32x256xf32>, vector<4x256xf32> -> vector<4x256xf32>
    %42 = arith.addf %35, %41 : vector<4x256xf32>
    %cst_31 = arith.constant 0.000000e+00 : f32
    %43 = vector.broadcast %cst_31 : f32 to vector<32x15xf32>
    %44 = vector.extract_strided_slice %1 {offsets = [0, 0], sizes = [32, 241], strides = [1, 1]} : vector<32x256xf32> to vector<32x241xf32>
    %45 = tpu.concatenate %43, %44 in 1 : vector<32x15xf32>, vector<32x241xf32> -> vector<32x256xf32>
    %46 = vector.broadcast %25 : vector<1x256xf32> to vector<32x256xf32>
    %47 = arith.mulf %45, %46 : vector<32x256xf32>
    %c2_32 = arith.constant 2 : index
    %c0_33 = arith.constant 0 : index
    %c0_34 = arith.constant 0 : index
    %48 = vector.load %arg4[%c2_32, %c0_33, %c0_34] : memref<9x4x32xf32, #tpu.memory_space<vmem>>, vector<1x4x32xf32>
    %49 = vector.shape_cast %48 : vector<1x4x32xf32> to vector<4x32xf32>
    %cst_35 = arith.constant dense<0.000000e+00> : vector<4x256xf32>
    %50 = tpu.matmul %49, %47, %cst_35 {dimension_numbers = #tpu.dot_dimension_numbers<[1], [0], [0], [1], [0, 0, 1, 1], [], []>} : vector<4x32xf32>, vector<32x256xf32>, vector<4x256xf32> -> vector<4x256xf32>
    %51 = arith.addf %42, %50 : vector<4x256xf32>
    %cst_36 = arith.constant 0.000000e+00 : f32
    %52 = vector.broadcast %cst_36 : f32 to vector<32x1xf32>
    %53 = vector.extract_strided_slice %1 {offsets = [0, 0], sizes = [32, 255], strides = [1, 1]} : vector<32x256xf32> to vector<32x255xf32>
    %54 = tpu.concatenate %52, %53 in 1 : vector<32x1xf32>, vector<32x255xf32> -> vector<32x256xf32>
    %55 = vector.broadcast %24 : vector<1x256xf32> to vector<32x256xf32>
    %56 = arith.mulf %54, %55 : vector<32x256xf32>
    %c3 = arith.constant 3 : index
    %c0_37 = arith.constant 0 : index
    %c0_38 = arith.constant 0 : index
    %57 = vector.load %arg4[%c3, %c0_37, %c0_38] : memref<9x4x32xf32, #tpu.memory_space<vmem>>, vector<1x4x32xf32>
    %58 = vector.shape_cast %57 : vector<1x4x32xf32> to vector<4x32xf32>
    %cst_39 = arith.constant dense<0.000000e+00> : vector<4x256xf32>
    %59 = tpu.matmul %58, %56, %cst_39 {dimension_numbers = #tpu.dot_dimension_numbers<[1], [0], [0], [1], [0, 0, 1, 1], [], []>} : vector<4x32xf32>, vector<32x256xf32>, vector<4x256xf32> -> vector<4x256xf32>
    %60 = arith.addf %51, %59 : vector<4x256xf32>
    %c4 = arith.constant 4 : index
    %c0_40 = arith.constant 0 : index
    %c0_41 = arith.constant 0 : index
    %61 = vector.load %arg4[%c4, %c0_40, %c0_41] : memref<9x4x32xf32, #tpu.memory_space<vmem>>, vector<1x4x32xf32>
    %62 = vector.shape_cast %61 : vector<1x4x32xf32> to vector<4x32xf32>
    %cst_42 = arith.constant dense<0.000000e+00> : vector<4x256xf32>
    %63 = tpu.matmul %62, %1, %cst_42 {dimension_numbers = #tpu.dot_dimension_numbers<[1], [0], [0], [1], [0, 0, 1, 1], [], []>} : vector<4x32xf32>, vector<32x256xf32>, vector<4x256xf32> -> vector<4x256xf32>
    %64 = arith.addf %60, %63 : vector<4x256xf32>
    %65 = vector.extract_strided_slice %1 {offsets = [0, 1], sizes = [32, 255], strides = [1, 1]} : vector<32x256xf32> to vector<32x255xf32>
    %cst_43 = arith.constant 0.000000e+00 : f32
    %66 = vector.broadcast %cst_43 : f32 to vector<32x1xf32>
    %67 = tpu.concatenate %65, %66 in 1 : vector<32x255xf32>, vector<32x1xf32> -> vector<32x256xf32>
    %68 = vector.broadcast %25 : vector<1x256xf32> to vector<32x256xf32>
    %69 = arith.mulf %67, %68 : vector<32x256xf32>
    %c5 = arith.constant 5 : index
    %c0_44 = arith.constant 0 : index
    %c0_45 = arith.constant 0 : index
    %70 = vector.load %arg4[%c5, %c0_44, %c0_45] : memref<9x4x32xf32, #tpu.memory_space<vmem>>, vector<1x4x32xf32>
    %71 = vector.shape_cast %70 : vector<1x4x32xf32> to vector<4x32xf32>
    %cst_46 = arith.constant dense<0.000000e+00> : vector<4x256xf32>
    %72 = tpu.matmul %71, %69, %cst_46 {dimension_numbers = #tpu.dot_dimension_numbers<[1], [0], [0], [1], [0, 0, 1, 1], [], []>} : vector<4x32xf32>, vector<32x256xf32>, vector<4x256xf32> -> vector<4x256xf32>
    %73 = arith.addf %64, %72 : vector<4x256xf32>
    %74 = vector.extract_strided_slice %1 {offsets = [0, 15], sizes = [32, 241], strides = [1, 1]} : vector<32x256xf32> to vector<32x241xf32>
    %cst_47 = arith.constant 0.000000e+00 : f32
    %75 = vector.broadcast %cst_47 : f32 to vector<32x15xf32>
    %76 = tpu.concatenate %74, %75 in 1 : vector<32x241xf32>, vector<32x15xf32> -> vector<32x256xf32>
    %77 = vector.broadcast %24 : vector<1x256xf32> to vector<32x256xf32>
    %78 = arith.mulf %76, %77 : vector<32x256xf32>
    %c6 = arith.constant 6 : index
    %c0_48 = arith.constant 0 : index
    %c0_49 = arith.constant 0 : index
    %79 = vector.load %arg4[%c6, %c0_48, %c0_49] : memref<9x4x32xf32, #tpu.memory_space<vmem>>, vector<1x4x32xf32>
    %80 = vector.shape_cast %79 : vector<1x4x32xf32> to vector<4x32xf32>
    %cst_50 = arith.constant dense<0.000000e+00> : vector<4x256xf32>
    %81 = tpu.matmul %80, %78, %cst_50 {dimension_numbers = #tpu.dot_dimension_numbers<[1], [0], [0], [1], [0, 0, 1, 1], [], []>} : vector<4x32xf32>, vector<32x256xf32>, vector<4x256xf32> -> vector<4x256xf32>
    %82 = arith.addf %73, %81 : vector<4x256xf32>
    %83 = vector.extract_strided_slice %1 {offsets = [0, 16], sizes = [32, 240], strides = [1, 1]} : vector<32x256xf32> to vector<32x240xf32>
    %cst_51 = arith.constant 0.000000e+00 : f32
    %84 = vector.broadcast %cst_51 : f32 to vector<32x16xf32>
    %85 = tpu.concatenate %83, %84 in 1 : vector<32x240xf32>, vector<32x16xf32> -> vector<32x256xf32>
    %c7 = arith.constant 7 : index
    %c0_52 = arith.constant 0 : index
    %c0_53 = arith.constant 0 : index
    %86 = vector.load %arg4[%c7, %c0_52, %c0_53] : memref<9x4x32xf32, #tpu.memory_space<vmem>>, vector<1x4x32xf32>
    %87 = vector.shape_cast %86 : vector<1x4x32xf32> to vector<4x32xf32>
    %cst_54 = arith.constant dense<0.000000e+00> : vector<4x256xf32>
    %88 = tpu.matmul %87, %85, %cst_54 {dimension_numbers = #tpu.dot_dimension_numbers<[1], [0], [0], [1], [0, 0, 1, 1], [], []>} : vector<4x32xf32>, vector<32x256xf32>, vector<4x256xf32> -> vector<4x256xf32>
    %89 = arith.addf %82, %88 : vector<4x256xf32>
    %90 = vector.extract_strided_slice %1 {offsets = [0, 17], sizes = [32, 239], strides = [1, 1]} : vector<32x256xf32> to vector<32x239xf32>
    %cst_55 = arith.constant 0.000000e+00 : f32
    %91 = vector.broadcast %cst_55 : f32 to vector<32x17xf32>
    %92 = tpu.concatenate %90, %91 in 1 : vector<32x239xf32>, vector<32x17xf32> -> vector<32x256xf32>
    %93 = vector.broadcast %25 : vector<1x256xf32> to vector<32x256xf32>
    %94 = arith.mulf %92, %93 : vector<32x256xf32>
    %c8 = arith.constant 8 : index
    %c0_56 = arith.constant 0 : index
    %c0_57 = arith.constant 0 : index
    %95 = vector.load %arg4[%c8, %c0_56, %c0_57] : memref<9x4x32xf32, #tpu.memory_space<vmem>>, vector<1x4x32xf32>
    %96 = vector.shape_cast %95 : vector<1x4x32xf32> to vector<4x32xf32>
    %cst_58 = arith.constant dense<0.000000e+00> : vector<4x256xf32>
    %97 = tpu.matmul %96, %94, %cst_58 {dimension_numbers = #tpu.dot_dimension_numbers<[1], [0], [0], [1], [0, 0, 1, 1], [], []>} : vector<4x32xf32>, vector<32x256xf32>, vector<4x256xf32> -> vector<4x256xf32>
    %98 = arith.addf %89, %97 : vector<4x256xf32>
    %c0_59 = arith.constant 0 : index
    %c0_60 = arith.constant 0 : index
    %99 = vector.load %arg5[%c0_59, %c0_60] : memref<4x1xf32, #tpu.memory_space<vmem>>, vector<4x1xf32>
    %100 = vector.broadcast %99 : vector<4x1xf32> to vector<4x256xf32>
    %101 = arith.addf %98, %100 : vector<4x256xf32>
    %cst_61 = arith.constant 0.000000e+00 : f32
    %102 = vector.broadcast %cst_61 : f32 to vector<4x256xf32>
    %103 = arith.maximumf %101, %102 : vector<4x256xf32>
    %cst_62 = arith.constant 1.000000e+00 : f32
    %104 = vector.broadcast %cst_62 : f32 to vector<1x256xf32>
    %cst_63 = arith.constant dense<0.000000e+00> : vector<1x4xf32>
    %105 = tpu.matmul %104, %23, %cst_63 {dimension_numbers = #tpu.dot_dimension_numbers<[1], [1], [0], [0], [0, 0, 1, 0], [], []>} : vector<1x256xf32>, vector<4x256xf32>, vector<1x4xf32> -> vector<1x4xf32>
    %cst_64 = arith.constant 3.906250e-03 : f32
    %106 = vector.broadcast %cst_64 : f32 to vector<1x4xf32>
    %107 = arith.mulf %105, %106 : vector<1x4xf32>
    %cst_65 = arith.constant dense<0.000000e+00> : vector<1x4xf32>
    %108 = tpu.matmul %104, %103, %cst_65 {dimension_numbers = #tpu.dot_dimension_numbers<[1], [1], [0], [0], [0, 0, 1, 0], [], []>} : vector<1x256xf32>, vector<4x256xf32>, vector<1x4xf32> -> vector<1x4xf32>
    %cst_66 = arith.constant 3.906250e-03 : f32
    %109 = vector.broadcast %cst_66 : f32 to vector<1x4xf32>
    %110 = arith.mulf %108, %109 : vector<1x4xf32>
    %c0_67 = arith.constant 0 : index
    %c0_68 = arith.constant 0 : index
    %111 = vector.load %arg8[%c0_67, %c0_68] : memref<4x3xf32, #tpu.memory_space<vmem>>, vector<4x3xf32>
    %cst_69 = arith.constant dense<0.000000e+00> : vector<1x3xf32>
    %112 = tpu.matmul %107, %111, %cst_69 {dimension_numbers = #tpu.dot_dimension_numbers<[1], [0], [0], [1], [0, 0, 1, 1], [], []>} : vector<1x4xf32>, vector<4x3xf32>, vector<1x3xf32> -> vector<1x3xf32>
    %c0_70 = arith.constant 0 : index
    %c0_71 = arith.constant 0 : index
    %113 = vector.load %arg9[%c0_70, %c0_71] : memref<4x3xf32, #tpu.memory_space<vmem>>, vector<4x3xf32>
    %cst_72 = arith.constant dense<0.000000e+00> : vector<1x3xf32>
    %114 = tpu.matmul %110, %113, %cst_72 {dimension_numbers = #tpu.dot_dimension_numbers<[1], [0], [0], [1], [0, 0, 1, 1], [], []>} : vector<1x4xf32>, vector<4x3xf32>, vector<1x3xf32> -> vector<1x3xf32>
    %115 = arith.addf %112, %114 : vector<1x3xf32>
    %c0_73 = arith.constant 0 : index
    %c0_74 = arith.constant 0 : index
    %116 = vector.load %arg10[%c0_73, %c0_74] : memref<1x3xf32, #tpu.memory_space<vmem>>, vector<1x3xf32>
    %117 = arith.addf %115, %116 : vector<1x3xf32>
    %cst_75 = arith.constant dense<0xFF800000> : vector<1xf32>
    %118 = vector.multi_reduction <maximumf>, %117, %cst_75 [1] : vector<1x3xf32> to vector<1xf32>
    %119 = vector.shape_cast %118 : vector<1xf32> to vector<1x1xf32>
    %120 = vector.broadcast %119 : vector<1x1xf32> to vector<1x3xf32>
    %121 = arith.subf %117, %120 : vector<1x3xf32>
    %122 = math.exp %121 : vector<1x3xf32>
    %cst_76 = arith.constant dense<0.000000e+00> : vector<1xf32>
    %123 = vector.multi_reduction <add>, %122, %cst_76 [1] : vector<1x3xf32> to vector<1xf32>
    %124 = vector.shape_cast %123 : vector<1xf32> to vector<1x1xf32>
    %125 = vector.broadcast %124 : vector<1x1xf32> to vector<1x3xf32>
    %126 = arith.divf %122, %125 : vector<1x3xf32>
    %c0_77 = arith.constant 0 : index
    %c0_78 = arith.constant 0 : index
    %c0_79 = arith.constant 0 : index
    %127 = vector.load %arg11[%c0_77, %c0_78, %c0_79] : memref<1x1x3xf32, #tpu.memory_space<vmem>>, vector<1x1x3xf32>
    %128 = vector.shape_cast %127 : vector<1x1x3xf32> to vector<1x3xf32>
    %129 = vector.shape_cast %126 : vector<1x3xf32> to vector<1x1x3xf32>
    tpu.vector_store %arg11[%c0_77, %c0_78, %c0_79], %129 {strides = array<i32>} : memref<1x1x3xf32, #tpu.memory_space<vmem>>, vector<1x1x3xf32>,
    return
  }
  func.func @transform_0(%arg0: i32) -> (i32, i32, i32) {
    %c0_i32 = arith.constant 0 : i32
    %c0_i32_0 = arith.constant 0 : i32
    %c0_i32_1 = arith.constant 0 : i32
    return %arg0, %c0_i32, %c0_i32_0 : i32, i32, i32
  }
  func.func @transform_1(%arg0: i32) -> (i32, i32, i32) {
    %c0_i32 = arith.constant 0 : i32
    %c0_i32_0 = arith.constant 0 : i32
    %c0_i32_1 = arith.constant 0 : i32
    %c0_i32_2 = arith.constant 0 : i32
    return %c0_i32, %c0_i32_0, %c0_i32_1 : i32, i32, i32
  }
  func.func @transform_2(%arg0: i32) -> (i32, i32) {
    %c0_i32 = arith.constant 0 : i32
    %c0_i32_0 = arith.constant 0 : i32
    %c0_i32_1 = arith.constant 0 : i32
    return %c0_i32, %c0_i32_0 : i32, i32
  }
  func.func @transform_3(%arg0: i32) -> (i32, i32, i32) {
    %c0_i32 = arith.constant 0 : i32
    %c0_i32_0 = arith.constant 0 : i32
    %c0_i32_1 = arith.constant 0 : i32
    %c0_i32_2 = arith.constant 0 : i32
    return %c0_i32, %c0_i32_0, %c0_i32_1 : i32, i32, i32
  }
  func.func @transform_4(%arg0: i32) -> (i32, i32) {
    %c0_i32 = arith.constant 0 : i32
    %c0_i32_0 = arith.constant 0 : i32
    %c0_i32_1 = arith.constant 0 : i32
    return %c0_i32, %c0_i32_0 : i32, i32
  }
  func.func @transform_5(%arg0: i32) -> (i32, i32) {
    %c0_i32 = arith.constant 0 : i32
    %c0_i32_0 = arith.constant 0 : i32
    %c0_i32_1 = arith.constant 0 : i32
    return %c0_i32, %c0_i32_0 : i32, i32
  }
  func.func @transform_6(%arg0: i32) -> (i32, i32) {
    %c0_i32 = arith.constant 0 : i32
    %c0_i32_0 = arith.constant 0 : i32
    %c0_i32_1 = arith.constant 0 : i32
    return %c0_i32, %c0_i32_0 : i32, i32
  }
  func.func @transform_7(%arg0: i32) -> (i32, i32) {
    %c0_i32 = arith.constant 0 : i32
    %c0_i32_0 = arith.constant 0 : i32
    %c0_i32_1 = arith.constant 0 : i32
    return %c0_i32, %c0_i32_0 : i32, i32
  }
  func.func @transform_8(%arg0: i32) -> (i32, i32) {
    %c0_i32 = arith.constant 0 : i32
    %c0_i32_0 = arith.constant 0 : i32
    %c0_i32_1 = arith.constant 0 : i32
    return %c0_i32, %c0_i32_0 : i32, i32
  }
  func.func @transform_9(%arg0: i32) -> (i32, i32) {
    %c0_i32 = arith.constant 0 : i32
    %c0_i32_0 = arith.constant 0 : i32
    %c0_i32_1 = arith.constant 0 : i32
    return %c0_i32, %c0_i32_0 : i32, i32
  }
  func.func @transform_10(%arg0: i32) -> (i32, i32, i32) {
    %c0_i32 = arith.constant 0 : i32
    %c0_i32_0 = arith.constant 0 : i32
    %c0_i32_1 = arith.constant 0 : i32
    return %arg0, %c0_i32, %c0_i32_0 : i32, i32, i32
  }
}

</mosaic_0001>

<llo_original>
// kernel: lightweight_hybrid_gate_forward.1
$region0: #{lightweight_hybrid_gate_forward.1}
  #allocation0 [shape = 'u32[]', space=smem, size = 0x4, offset = 0x4, fixed_abs, tag = 'smem constant byte address 0x4 - core index']
  #allocation1 [shape = 'u32[144,128]{1,0:T(1,128)}', space=vmem, size = 0x12000, scoped, tag = 'internal scratch']
  %s0 = inlined_call_operand.vmem [shape: f32[2,32,256], index: 0, kind: input, shape index: {}]
  %s1 = inlined_call_operand.vmem [shape: f32[3,4,32], index: 1, kind: input, shape index: {}]
  %s2 = inlined_call_operand.vmem [shape: f32[4,1], index: 2, kind: input, shape index: {}]
  %s3 = inlined_call_operand.vmem [shape: f32[9,4,32], index: 3, kind: input, shape index: {}]
  %s4 = inlined_call_operand.vmem [shape: f32[4,1], index: 4, kind: input, shape index: {}]
  %s5 = inlined_call_operand.vmem [shape: f32[1,256], index: 5, kind: input, shape index: {}]
  %s6 = inlined_call_operand.vmem [shape: f32[1,256], index: 6, kind: input, shape index: {}]
  %s7 = inlined_call_operand.vmem [shape: f32[4,3], index: 7, kind: input, shape index: {}]
  %s8 = inlined_call_operand.vmem [shape: f32[4,3], index: 8, kind: input, shape index: {}]
  %s9 = inlined_call_operand.vmem [shape: f32[1,3], index: 9, kind: input, shape index: {}]
  %s10 = inlined_call_operand.hbm [shape: f32[2,1,3], index: 10, kind: output, shape index: {}]
  %s11 = sld [smem:[#allocation0]]
  $region73: #{lightweight_hybrid_gate_forward.1} parent=0
    _
  %s13 = ssub.s32 1, %s11
  %s14 = scalar_select 0, %s13, %s11
  $region1: #{lightweight_hybrid_gate_forward.1} parent=0
    #allocation2 [shape = 'u8[1024]{0}', space=vmem, size = 0x400, scoped, tag = 'output window, operand 0']
    #allocation3 [shape = 's32[2]{0}', space=sflag, size = 0x8, scoped, tag = 'scoped memory for lightweight_hybrid_gate_forward.1']
    %15 = vsyncpa [#allocation3], 0
    %s16 = scalar_lea.sflag [#allocation3], 1
    %17 = vsyncpa %s16, 0
    loop: start=0, step=1, limit=4
    $region2: #{lightweight_hybrid_gate_forward.1} parent=1 // loop_pre_header
      _
    $region3: #{lightweight_hybrid_gate_forward.1} parent=1 // loop_header
      %s19 = sphi 0, %s23
      %p20 = scmp.ge.s32.totalorder %s19, 4
      %s29 = sphi 0, %s31
      %s32 = sphi 0, %s29
      %s33 = sphi 0, %s32
      %s49 = sphi 0, %s33
      %s53 = sphi 0, %s53
      %s55 = sphi 0, %s53
      %s56 = sphi 0, %s55
      %s70 = sphi 0, %s56
      %s74 = sphi 0, %s74
      %s76 = sphi 0, %s74
      %s77 = sphi 0, %s76
      %s91 = sphi 0, %s77
      %s95 = sphi 0, %s95
      %s97 = sphi 0, %s95
      %s98 = sphi 0, %s97
      %s112 = sphi 0, %s98
      %s116 = sphi 0, %s116
      %s118 = sphi 0, %s116
      %s119 = sphi 0, %s118
      %s133 = sphi 0, %s119
      %s137 = sphi 0, %s137
      %s139 = sphi 0, %s137
      %s140 = sphi 0, %s139
      %s154 = sphi 0, %s140
      %s158 = sphi 0, %s158
      %s160 = sphi 0, %s158
      %s161 = sphi 0, %s160
      %s175 = sphi 0, %s161
      %s179 = sphi 0, %s179
      %s181 = sphi 0, %s179
      %s182 = sphi 0, %s181
      %s196 = sphi 0, %s182
      %s200 = sphi 0, %s200
      %s202 = sphi 0, %s200
      %s203 = sphi 0, %s202
      %s217 = sphi 0, %s203
      %s221 = sphi 0, %s221
      %s223 = sphi 0, %s221
      %s224 = sphi 0, %s223
      %s238 = sphi 0, %s224
      %s244 = sphi 0, %s246
      %s247 = sphi 0, %s244
      %s248 = sphi 0, %s247
      %s264 = sphi 0, %s248
    $region4: #{lightweight_hybrid_gate_forward.1} parent=1 // loop_header_branch
      %22 = sbr.rel (%p20) target = $region8
    $region5: #{lightweight_hybrid_gate_forward.1} parent=1 // loop_body
      %s24 = ssub.s32 %s19, 1
      %s25 = ssub.s32 %s19, 2
      %s26 = sadd.s32 %s19, 1
      %s27 = ssub.s32 %s19, %s26
      %p28 = scmp.eq.s32.totalorder %s27, 0
      %s30 = sadd.s32 %s29, 1
      %s31 = scalar_select %p28, %s29, %s30
      %p34 = pneg %p28
      %p35 = scmp.eq.s32.totalorder %s19, 1
      %p36 = por %p34, %p35
      %p37 = scmp.ne.s32.totalorder %s29, %s32
      %p38 = scmp.eq.s32.totalorder %s19, 0
      %p39 = por %p37, %p38
      %p40 = scmp.ne.s32.totalorder %s29, %s32
      %p41 = scmp.eq.s32.totalorder %s24, 1
      %p42 = por %p40, %p41
      %p43 = scmp.ne.s32.totalorder %s32, %s33
      %p44 = scmp.eq.s32.totalorder %s24, 0
      %p45 = por %p43, %p44
      %p46 = scmp.ne.s32.totalorder %s32, %s33
      %p47 = scmp.eq.s32.totalorder %s25, 1
      %p48 = por %p46, %p47
      %p50 = scmp.ne.s32.totalorder %s33, %s49
      %p51 = scmp.eq.s32.totalorder %s25, 0
      %p52 = por %p50, %p51
      %s54 = sadd.s32 %s53, 1
      %p57 = scmp.eq.s32.totalorder %s19, 1
      %p58 = scmp.ne.s32.totalorder %s53, %s55
      %p59 = scmp.eq.s32.totalorder %s19, 0
      %p60 = por %p58, %p59
      %p61 = scmp.ne.s32.totalorder %s53, %s55
      %p62 = scmp.eq.s32.totalorder %s24, 1
      %p63 = por %p61, %p62
      %p64 = scmp.ne.s32.totalorder %s55, %s56
      %p65 = scmp.eq.s32.totalorder %s24, 0
      %p66 = por %p64, %p65
      %p67 = scmp.ne.s32.totalorder %s55, %s56
      %p68 = scmp.eq.s32.totalorder %s25, 1
      %p69 = por %p67, %p68
      %p71 = scmp.ne.s32.totalorder %s56, %s70
      %p72 = scmp.eq.s32.totalorder %s25, 0
      %p73 = por %p71, %p72
      %s75 = sadd.s32 %s74, 1
      %p78 = scmp.eq.s32.totalorder %s19, 1
      %p79 = scmp.ne.s32.totalorder %s74, %s76
      %p80 = scmp.eq.s32.totalorder %s19, 0
      %p81 = por %p79, %p80
      %p82 = scmp.ne.s32.totalorder %s74, %s76
      %p83 = scmp.eq.s32.totalorder %s24, 1
      %p84 = por %p82, %p83
      %p85 = scmp.ne.s32.totalorder %s76, %s77
      %p86 = scmp.eq.s32.totalorder %s24, 0
      %p87 = por %p85, %p86
      %p88 = scmp.ne.s32.totalorder %s76, %s77
      %p89 = scmp.eq.s32.totalorder %s25, 1
      %p90 = por %p88, %p89
      %p92 = scmp.ne.s32.totalorder %s77, %s91
      %p93 = scmp.eq.s32.totalorder %s25, 0
      %p94 = por %p92, %p93
      %s96 = sadd.s32 %s95, 1
      %p99 = scmp.eq.s32.totalorder %s19, 1
      %p100 = scmp.ne.s32.totalorder %s95, %s97
      %p101 = scmp.eq.s32.totalorder %s19, 0
      %p102 = por %p100, %p101
      %p103 = scmp.ne.s32.totalorder %s95, %s97
      %p104 = scmp.eq.s32.totalorder %s24, 1
      %p105 = por %p103, %p104
      %p106 = scmp.ne.s32.totalorder %s97, %s98
      %p107 = scmp.eq.s32.totalorder %s24, 0
      %p108 = por %p106, %p107
      %p109 = scmp.ne.s32.totalorder %s97, %s98
      %p110 = scmp.eq.s32.totalorder %s25, 1
      %p111 = por %p109, %p110
      %p113 = scmp.ne.s32.totalorder %s98, %s112
      %p114 = scmp.eq.s32.totalorder %s25, 0
      %p115 = por %p113, %p114
      %s117 = sadd.s32 %s116, 1
      %p120 = scmp.eq.s32.totalorder %s19, 1
      %p121 = scmp.ne.s32.totalorder %s116, %s118
      %p122 = scmp.eq.s32.totalorder %s19, 0
      %p123 = por %p121, %p122
      %p124 = scmp.ne.s32.totalorder %s116, %s118
      %p125 = scmp.eq.s32.totalorder %s24, 1
      %p126 = por %p124, %p125
      %p127 = scmp.ne.s32.totalorder %s118, %s119
      %p128 = scmp.eq.s32.totalorder %s24, 0
      %p129 = por %p127, %p128
      %p130 = scmp.ne.s32.totalorder %s118, %s119
      %p131 = scmp.eq.s32.totalorder %s25, 1
      %p132 = por %p130, %p131
      %p134 = scmp.ne.s32.totalorder %s119, %s133
      %p135 = scmp.eq.s32.totalorder %s25, 0
      %p136 = por %p134, %p135
      %s138 = sadd.s32 %s137, 1
      %p141 = scmp.eq.s32.totalorder %s19, 1
      %p142 = scmp.ne.s32.totalorder %s137, %s139
      %p143 = scmp.eq.s32.totalorder %s19, 0
      %p144 = por %p142, %p143
      %p145 = scmp.ne.s32.totalorder %s137, %s139
      %p146 = scmp.eq.s32.totalorder %s24, 1
      %p147 = por %p145, %p146
      %p148 = scmp.ne.s32.totalorder %s139, %s140
      %p149 = scmp.eq.s32.totalorder %s24, 0
      %p150 = por %p148, %p149
      %p151 = scmp.ne.s32.totalorder %s139, %s140
      %p152 = scmp.eq.s32.totalorder %s25, 1
      %p153 = por %p151, %p152
      %p155 = scmp.ne.s32.totalorder %s140, %s154
      %p156 = scmp.eq.s32.totalorder %s25, 0
      %p157 = por %p155, %p156
      %s159 = sadd.s32 %s158, 1
      %p162 = scmp.eq.s32.totalorder %s19, 1
      %p163 = scmp.ne.s32.totalorder %s158, %s160
      %p164 = scmp.eq.s32.totalorder %s19, 0
      %p165 = por %p163, %p164
      %p166 = scmp.ne.s32.totalorder %s158, %s160
      %p167 = scmp.eq.s32.totalorder %s24, 1
      %p168 = por %p166, %p167
      %p169 = scmp.ne.s32.totalorder %s160, %s161
      %p170 = scmp.eq.s32.totalorder %s24, 0
      %p171 = por %p169, %p170
      %p172 = scmp.ne.s32.totalorder %s160, %s161
      %p173 = scmp.eq.s32.totalorder %s25, 1
      %p174 = por %p172, %p173
      %p176 = scmp.ne.s32.totalorder %s161, %s175
      %p177 = scmp.eq.s32.totalorder %s25, 0
      %p178 = por %p176, %p177
      %s180 = sadd.s32 %s179, 1
      %p183 = scmp.eq.s32.totalorder %s19, 1
      %p184 = scmp.ne.s32.totalorder %s179, %s181
      %p185 = scmp.eq.s32.totalorder %s19, 0
      %p186 = por %p184, %p185
      %p187 = scmp.ne.s32.totalorder %s179, %s181
      %p188 = scmp.eq.s32.totalorder %s24, 1
      %p189 = por %p187, %p188
      %p190 = scmp.ne.s32.totalorder %s181, %s182
      %p191 = scmp.eq.s32.totalorder %s24, 0
      %p192 = por %p190, %p191
      %p193 = scmp.ne.s32.totalorder %s181, %s182
      %p194 = scmp.eq.s32.totalorder %s25, 1
      %p195 = por %p193, %p194
      %p197 = scmp.ne.s32.totalorder %s182, %s196
      %p198 = scmp.eq.s32.totalorder %s25, 0
      %p199 = por %p197, %p198
      %s201 = sadd.s32 %s200, 1
      %p204 = scmp.eq.s32.totalorder %s19, 1
      %p205 = scmp.ne.s32.totalorder %s200, %s202
      %p206 = scmp.eq.s32.totalorder %s19, 0
      %p207 = por %p205, %p206
      %p208 = scmp.ne.s32.totalorder %s200, %s202
      %p209 = scmp.eq.s32.totalorder %s24, 1
      %p210 = por %p208, %p209
      %p211 = scmp.ne.s32.totalorder %s202, %s203
      %p212 = scmp.eq.s32.totalorder %s24, 0
      %p213 = por %p211, %p212
      %p214 = scmp.ne.s32.totalorder %s202, %s203
      %p215 = scmp.eq.s32.totalorder %s25, 1
      %p216 = por %p214, %p215
      %p218 = scmp.ne.s32.totalorder %s203, %s217
      %p219 = scmp.eq.s32.totalorder %s25, 0
      %p220 = por %p218, %p219
      %s222 = sadd.s32 %s221, 1
      %p225 = scmp.eq.s32.totalorder %s19, 1
      %p226 = scmp.ne.s32.totalorder %s221, %s223
      %p227 = scmp.eq.s32.totalorder %s19, 0
      %p228 = por %p226, %p227
      %p229 = scmp.ne.s32.totalorder %s221, %s223
      %p230 = scmp.eq.s32.totalorder %s24, 1
      %p231 = por %p229, %p230
      %p232 = scmp.ne.s32.totalorder %s223, %s224
      %p233 = scmp.eq.s32.totalorder %s24, 0
      %p234 = por %p232, %p233
      %p235 = scmp.ne.s32.totalorder %s223, %s224
      %p236 = scmp.eq.s32.totalorder %s25, 1
      %p237 = por %p235, %p236
      %p239 = scmp.ne.s32.totalorder %s224, %s238
      %p240 = scmp.eq.s32.totalorder %s25, 0
      %p241 = por %p239, %p240
      %s242 = ssub.s32 %s19, %s26
      %p243 = scmp.eq.s32.totalorder %s242, 0
      %s245 = sadd.s32 %s244, 1
      %s246 = scalar_select %p243, %s244, %s245
      %p249 = pneg %p243
      %p250 = scmp.eq.s32.totalorder %s19, 1
      %p251 = por %p249, %p250
      %p252 = scmp.ne.s32.totalorder %s244, %s247
      %p253 = scmp.eq.s32.totalorder %s19, 0
      %p254 = por %p252, %p253
      %p255 = scmp.ne.s32.totalorder %s244, %s247
      %p256 = scmp.eq.s32.totalorder %s24, 1
      %p257 = por %p255, %p256
      %p258 = scmp.ne.s32.totalorder %s247, %s248
      %p259 = scmp.eq.s32.totalorder %s24, 0
      %p260 = por %p258, %p259
      %p261 = scmp.ne.s32.totalorder %s247, %s248
      %p262 = scmp.eq.s32.totalorder %s25, 1
      %p263 = por %p261, %p262
      %p265 = scmp.ne.s32.totalorder %s248, %s264
      %p266 = scmp.eq.s32.totalorder %s25, 0
      %p267 = por %p265, %p266
      %p268 = scmp.le.s32.totalorder 1, %s19
      %p269 = scmp.lt.s32.totalorder %s19, 3
      %p270 = pnand %p268, %p269
      %p271 = pneg %p270
      // Predicated region
      $region9: #{lightweight_hybrid_gate_forward.1} parent=5 // pred_check
        _
      $region10: #{lightweight_hybrid_gate_forward.1} parent=5 // pred_check_branch
        %273 = sbr.rel (%p270) target = $region12
      $region11: #{lightweight_hybrid_gate_forward.1} parent=5 // pred_region
        %s274 = ssub.s32 %s19, 1
        // Predicated region
        $region13: #{lightweight_hybrid_gate_forward.1} parent=11 // pred_check
          %p275 = pneg %p66
        $region14: #{lightweight_hybrid_gate_forward.1} parent=11 // pred_check_branch
          %277 = sbr.rel (%p275) target = $region16
        $region15: #{lightweight_hybrid_gate_forward.1} parent=11 // pred_region
          _
        $region16: #{lightweight_hybrid_gate_forward.1} parent=11 // pred_fallthru
          _
        // Predicated region
        $region17: #{lightweight_hybrid_gate_forward.1} parent=11 // pred_check
          %p278 = pneg %p87
        $region18: #{lightweight_hybrid_gate_forward.1} parent=11 // pred_check_branch
          %280 = sbr.rel (%p278) target = $region20
        $region19: #{lightweight_hybrid_gate_forward.1} parent=11 // pred_region
          _
        $region20: #{lightweight_hybrid_gate_forward.1} parent=11 // pred_fallthru
          _
        // Predicated region
        $region21: #{lightweight_hybrid_gate_forward.1} parent=11 // pred_check
          %p281 = pneg %p108
        $region22: #{lightweight_hybrid_gate_forward.1} parent=11 // pred_check_branch
          %283 = sbr.rel (%p281) target = $region24
        $region23: #{lightweight_hybrid_gate_forward.1} parent=11 // pred_region
          _
        $region24: #{lightweight_hybrid_gate_forward.1} parent=11 // pred_fallthru
          _
        // Predicated region
        $region25: #{lightweight_hybrid_gate_forward.1} parent=11 // pred_check
          %p284 = pneg %p129
        $region26: #{lightweight_hybrid_gate_forward.1} parent=11 // pred_check_branch
          %286 = sbr.rel (%p284) target = $region28
        $region27: #{lightweight_hybrid_gate_forward.1} parent=11 // pred_region
          _
        $region28: #{lightweight_hybrid_gate_forward.1} parent=11 // pred_fallthru
          _
        // Predicated region
        $region29: #{lightweight_hybrid_gate_forward.1} parent=11 // pred_check
          %p287 = pneg %p150
        $region30: #{lightweight_hybrid_gate_forward.1} parent=11 // pred_check_branch
          %289 = sbr.rel (%p287) target = $region32
        $region31: #{lightweight_hybrid_gate_forward.1} parent=11 // pred_region
          _
        $region32: #{lightweight_hybrid_gate_forward.1} parent=11 // pred_fallthru
          _
        // Predicated region
        $region33: #{lightweight_hybrid_gate_forward.1} parent=11 // pred_check
          %p290 = pneg %p171
        $region34: #{lightweight_hybrid_gate_forward.1} parent=11 // pred_check_branch
          %292 = sbr.rel (%p290) target = $region36
        $region35: #{lightweight_hybrid_gate_forward.1} parent=11 // pred_region
          _
        $region36: #{lightweight_hybrid_gate_forward.1} parent=11 // pred_fallthru
          _
        // Predicated region
        $region37: #{lightweight_hybrid_gate_forward.1} parent=11 // pred_check
          %p293 = pneg %p192
        $region38: #{lightweight_hybrid_gate_forward.1} parent=11 // pred_check_branch
          %295 = sbr.rel (%p293) target = $region40
        $region39: #{lightweight_hybrid_gate_forward.1} parent=11 // pred_region
          _
        $region40: #{lightweight_hybrid_gate_forward.1} parent=11 // pred_fallthru
          _
        // Predicated region
        $region41: #{lightweight_hybrid_gate_forward.1} parent=11 // pred_check
          %p296 = pneg %p213
        $region42: #{lightweight_hybrid_gate_forward.1} parent=11 // pred_check_branch
          %298 = sbr.rel (%p296) target = $region44
        $region43: #{lightweight_hybrid_gate_forward.1} parent=11 // pred_region
          _
        $region44: #{lightweight_hybrid_gate_forward.1} parent=11 // pred_fallthru
          _
        // Predicated region
        $region45: #{lightweight_hybrid_gate_forward.1} parent=11 // pred_check
          %p299 = pneg %p234
        $region46: #{lightweight_hybrid_gate_forward.1} parent=11 // pred_check_branch
          %301 = sbr.rel (%p299) target = $region48
        $region47: #{lightweight_hybrid_gate_forward.1} parent=11 // pred_region
          _
        $region48: #{lightweight_hybrid_gate_forward.1} parent=11 // pred_fallthru
          _
      $region12: #{lightweight_hybrid_gate_forward.1} parent=5 // pred_fallthru
        _
      %p302 = scmp.lt.s32.totalorder %s19, 2
      // Predicated region
      $region49: #{lightweight_hybrid_gate_forward.1} parent=5 // pred_check
        %p303 = pneg %p302
      $region50: #{lightweight_hybrid_gate_forward.1} parent=5 // pred_check_branch
        %305 = sbr.rel (%p303) target = $region52
      $region51: #{lightweight_hybrid_gate_forward.1} parent=5 // pred_region
        // Predicated region
        $region53: #{lightweight_hybrid_gate_forward.1} parent=51 // pred_check
          %p306 = pneg %p39
        $region54: #{lightweight_hybrid_gate_forward.1} parent=51 // pred_check_branch
          %308 = sbr.rel (%p306) target = $region56
        $region55: #{lightweight_hybrid_gate_forward.1} parent=51 // pred_region
          %p309 = scmp.lt.s32.totalorder %s19, 1
          %s310 = scalar_select %p309, %s19, 1
          %s311 = smul.addr %s310, 8
          %s312 = smul.addr %s311, 8
          %s313 = scalar_lea.vmem %s0, %s312
        $region56: #{lightweight_hybrid_gate_forward.1} parent=51 // pred_fallthru
          _
      $region52: #{lightweight_hybrid_gate_forward.1} parent=5 // pred_fallthru
        _
      %p314 = scmp.le.s32.totalorder 1, %s19
      %p315 = scmp.lt.s32.totalorder %s19, 3
      %p316 = pnand %p314, %p315
      %p317 = pneg %p316
      // Predicated region
      $region57: #{lightweight_hybrid_gate_forward.1} parent=5 // pred_check
        _
      $region58: #{lightweight_hybrid_gate_forward.1} parent=5 // pred_check_branch
        %319 = sbr.rel (%p316) target = $region60
      $region59: #{lightweight_hybrid_gate_forward.1} parent=5 // pred_region
        %s320 = ssub.s32 %s19, 1
        %p321 = scmp.lt.s32.totalorder %s24, 1
        %s322 = scalar_select %p321, %s24, 1
        %s323 = smul.addr %s322, 8
        %s324 = smul.addr %s323, 8
        %s325 = scalar_lea.vmem %s0, %s324
        %p326 = pneg %p45
        %p327 = pneg %p42
        %p328 = pneg %p66
        %p329 = pneg %p63
        %p330 = pneg %p87
        %p331 = pneg %p84
        %p332 = pneg %p108
        %p333 = pneg %p105
        %p334 = pneg %p129
        %p335 = pneg %p126
        %p336 = pneg %p150
        %p337 = pneg %p147
        %p338 = pneg %p171
        %p339 = pneg %p168
        %p340 = pneg %p192
        %p341 = pneg %p189
        %p342 = pneg %p213
        %p343 = pneg %p210
        %p344 = pneg %p234
        %p345 = pneg %p231
        %p346 = pneg %p260
        %p347 = pneg %p257
        %s348 = sand.u32 %s247, 1
        %s349 = scalar_lea.sflag [#allocation3], %s348
        %s350 = sand.u32 %s247, 1
        %s351 = scalar_lea.vmem [#allocation2], %s350
        %p352 = scmp.lt.s32.totalorder %s24, 1
        %s353 = scalar_select %p352, %s24, 1
        %s354 = smul.addr %s353, 8
        %s355 = smul.addr %s354, 8
        %s356 = scalar_lea.vmem %s0, %s355
        %v357 = vld [vmem:[%s356] sm:$0xff]
        %v358 = vld [vmem:[%s356 + $0x8] sm:$0xff]
        %v359 = vld [vmem:[%s356 + $0x10] sm:$0xff]
        %v360 = vld [vmem:[%s356 + $0x18] sm:$0xff]
        %v361 = vld [vmem:[%s356 + $0x20] sm:$0xff]
        %v362 = vld [vmem:[%s356 + $0x28] sm:$0xff]
        %v363 = vld [vmem:[%s356 + $0x30] sm:$0xff]
        %v364 = vld [vmem:[%s356 + $0x38] sm:$0xff]
        %v365 = vld [vmem:[%s1] sm:$0xf]
        %374 = vrot.lane.b32.xlu0 %v357, 1
        %v375 = vpop.permute.xlu0 %374
        %376 = vrot.lane.b32.xlu0 %v358, 1
        %v377 = vpop.permute.xlu0 %376
        %378 = vrot.lane.b32.xlu0 %v359, 1
        %v379 = vpop.permute.xlu0 %378
        %380 = vrot.lane.b32.xlu0 %v360, 1
        %v381 = vpop.permute.xlu0 %380
        %382 = vrot.lane.b32.xlu0 %v361, 1
        %v383 = vpop.permute.xlu0 %382
        %384 = vrot.lane.b32.xlu0 %v362, 1
        %v385 = vpop.permute.xlu0 %384
        %386 = vrot.lane.b32.xlu0 %v363, 1
        %v387 = vpop.permute.xlu0 %386
        %388 = vrot.lane.b32.xlu0 %v364, 1
        %v389 = vpop.permute.xlu0 %388
        %vm390 = vcmask 7168
        %v391 = vsel %vm390, %v375, %v377
        %v392 = vsel %vm390, %v379, %v381
        %v393 = vsel %vm390, %v383, %v385
        %v394 = vsel %vm390, %v387, %v389
        %v403 = vsel %vm390, 0.0, %v375
        %v404 = vsel %vm390, 0.0, %v379
        %v405 = vsel %vm390, 0.0, %v383
        %v406 = vsel %vm390, 0.0, %v387
        %s407 = scalar_lea.vmem %s1, 4
        %v408 = vld [vmem:[%s407] sm:$0xf]
        %vm409 = vcmask 261120
        %v411 = vsel %vm409, %v408, 0
        %413 = vmatprep.subr.mxu0 %v358
        %414 = vmatpush1.msra.mxu0 %v357
        %415 = vmatprep.subr.mxu0 %v360
        %416 = vmatpush1.msra.mxu0 %v359
        %417 = vmatprep.subr.mxu0 %v362
        %418 = vmatpush1.msra.mxu0 %v361
        %419 = vmatprep.subr.mxu0 %v364
        %420 = vmatpush1.msra.mxu0 %v363
        %421 = vmatprep.subr.mxu0 0.0
        %422 = vmatpush1.msra.mxu0 0.0
        %423 = vmatprep.subr.mxu0 0.0
        %424 = vmatpush1.msra.mxu0 0.0
        %425 = vmatprep.subr.mxu0 0.0
        %426 = vmatpush1.msra.mxu0 0.0
        %427 = vmatprep.subr.mxu0 0.0
        %428 = vmatpush1.msra.mxu0 0.0
        %429 = vmatprep.subr.mxu0 0.0
        %430 = vmatpush1.msra.mxu0 0.0
        %431 = vmatprep.subr.mxu0 0.0
        %432 = vmatpush1.msra.mxu0 0.0
        %433 = vmatprep.subr.mxu0 0.0
        %434 = vmatpush1.msra.mxu0 0.0
        %435 = vmatprep.subr.mxu0 0.0
        %436 = vmatpush1.msra.mxu0 0.0
        %437 = vmatprep.subr.mxu0 0.0
        %438 = vmatpush1.msra.mxu0 0.0
        %439 = vmatprep.subr.mxu0 0.0
        %440 = vmatpush1.msra.mxu0 0.0
        %441 = vmatprep.subr.mxu0 0.0
        %442 = vmatpush1.msra.mxu0 0.0
        %443 = vmatprep.subr.mxu0 0.0
        %444 = vmatpush1.msra.mxu0 0.0
        %445 = vmatprep.subr.mxu0 0.0
        %446 = vmatpush1.msra.mxu0 0.0
        %447 = vmatprep.subr.mxu0 0.0
        %448 = vmatpush1.msra.mxu0 0.0
        %449 = vmatprep.subr.mxu0 0.0
        %450 = vmatpush1.msra.mxu0 0.0
        %451 = vmatprep.subr.mxu0 0.0
        %452 = vmatpush1.msra.mxu0 0.0
        %453 = vmatprep.subr.mxu0 0.0
        %454 = vmatpush1.msra.mxu0 0.0
        %455 = vmatprep.subr.mxu0 0.0
        %456 = vmatpush1.msra.mxu0 0.0
        %457 = vmatprep.subr.mxu0 0.0
        %458 = vmatpush1.msra.mxu0 0.0
        %459 = vmatprep.subr.mxu0 0.0
        %460 = vmatpush1.msra.mxu0 0.0
        %461 = vmatprep.subr.mxu0 0.0
        %462 = vmatpush1.msra.mxu0 0.0
        %463 = vmatprep.subr.mxu0 0.0
        %464 = vmatpush1.msra.mxu0 0.0
        %465 = vmatprep.subr.mxu0 0.0
        %466 = vmatpush1.msra.mxu0 0.0
        %467 = vmatprep.subr.mxu0 0.0
        %468 = vmatpush1.msra.mxu0 0.0
        %469 = vmatprep.subr.mxu0 0.0
        %470 = vmatpush1.msra.mxu0 0.0
        %471 = vmatprep.subr.mxu0 0.0
        %472 = vmatpush1.msra.mxu0 0.0
        %473 = vmatprep.subr.mxu0 0.0
        %474 = vmatpush1.msra.mxu0 0.0
        %475 = vmatprep.subr.mxu0 0.0
        %476 = vmatpush1.msra.mxu0 0.0
        %477 = vmatprep.mubr.f32.mxu0 0.0
        %478 = vmatmul.mubr.f32.gmra.mrb[0].mxu0 %v411
        %v479 = vpop.f32.mrb[0].mxu0
        %v480 = vadd.f32 0.0, %v479
        %v481 = vpop.f32.mrb[0].mxu0
        %v482 = vadd.f32 0.0, %v481
        %483 = vdwg.mxu0
        %v485 = vsel %vm409, %v365, 0
        %487 = vmatprep.subr.mxu0 %v391
        %488 = vmatpush1.msra.mxu0 %v403
        %489 = vmatprep.subr.mxu0 %v392
        %490 = vmatpush1.msra.mxu0 %v404
        %491 = vmatprep.subr.mxu0 %v393
        %492 = vmatpush1.msra.mxu0 %v405
        %493 = vmatprep.subr.mxu0 %v394
        %494 = vmatpush1.msra.mxu0 %v406
        %495 = vmatprep.subr.mxu0 0.0
        %496 = vmatpush1.msra.mxu0 0.0
        %497 = vmatprep.subr.mxu0 0.0
        %498 = vmatpush1.msra.mxu0 0.0
        %499 = vmatprep.subr.mxu0 0.0
        %500 = vmatpush1.msra.mxu0 0.0
        %501 = vmatprep.subr.mxu0 0.0
        %502 = vmatpush1.msra.mxu0 0.0
        %503 = vmatprep.subr.mxu0 0.0
        %504 = vmatpush1.msra.mxu0 0.0
        %505 = vmatprep.subr.mxu0 0.0
        %506 = vmatpush1.msra.mxu0 0.0
        %507 = vmatprep.subr.mxu0 0.0
        %508 = vmatpush1.msra.mxu0 0.0
        %509 = vmatprep.subr.mxu0 0.0
        %510 = vmatpush1.msra.mxu0 0.0
        %511 = vmatprep.subr.mxu0 0.0
        %512 = vmatpush1.msra.mxu0 0.0
        %513 = vmatprep.subr.mxu0 0.0
        %514 = vmatpush1.msra.mxu0 0.0
        %515 = vmatprep.subr.mxu0 0.0
        %516 = vmatpush1.msra.mxu0 0.0
        %517 = vmatprep.subr.mxu0 0.0
        %518 = vmatpush1.msra.mxu0 0.0
        %519 = vmatprep.subr.mxu0 0.0
        %520 = vmatpush1.msra.mxu0 0.0
        %521 = vmatprep.subr.mxu0 0.0
        %522 = vmatpush1.msra.mxu0 0.0
        %523 = vmatprep.subr.mxu0 0.0
        %524 = vmatpush1.msra.mxu0 0.0
        %525 = vmatprep.subr.mxu0 0.0
        %526 = vmatpush1.msra.mxu0 0.0
        %527 = vmatprep.subr.mxu0 0.0
        %528 = vmatpush1.msra.mxu0 0.0
        %529 = vmatprep.subr.mxu0 0.0
        %530 = vmatpush1.msra.mxu0 0.0
        %531 = vmatprep.subr.mxu0 0.0
        %532 = vmatpush1.msra.mxu0 0.0
        %533 = vmatprep.subr.mxu0 0.0
        %534 = vmatpush1.msra.mxu0 0.0
        %535 = vmatprep.subr.mxu0 0.0
        %536 = vmatpush1.msra.mxu0 0.0
        %537 = vmatprep.subr.mxu0 0.0
        %538 = vmatpush1.msra.mxu0 0.0
        %539 = vmatprep.subr.mxu0 0.0
        %540 = vmatpush1.msra.mxu0 0.0
        %541 = vmatprep.subr.mxu0 0.0
        %542 = vmatpush1.msra.mxu0 0.0
        %543 = vmatprep.subr.mxu0 0.0
        %544 = vmatpush1.msra.mxu0 0.0
        %545 = vmatprep.subr.mxu0 0.0
        %546 = vmatpush1.msra.mxu0 0.0
        %547 = vmatprep.subr.mxu0 0.0
        %548 = vmatpush1.msra.mxu0 0.0
        %549 = vmatprep.subr.mxu0 0.0
        %550 = vmatpush1.msra.mxu0 0.0
        %551 = vmatprep.mubr.f32.mxu0 0.0
        %552 = vmatmul.mubr.f32.gmra.mrb[0].mxu0 %v485
        %v553 = vpop.f32.mrb[0].mxu0
        %v554 = vadd.f32 %v480, %v553
        %v555 = vpop.f32.mrb[0].mxu0
        %v556 = vadd.f32 %v482, %v555
        %557 = vdwg.mxu0
        %s558 = scalar_lea.vmem %s1, 8
        %v559 = vld [vmem:[%s558] sm:$0xf]
        %560 = vrot.lane.b32.xlu0 %v357, 127
        %v561 = vpop.permute.xlu0 %560
        %562 = vrot.lane.b32.xlu0 %v358, 127
        %v563 = vpop.permute.xlu0 %562
        %564 = vrot.lane.b32.xlu0 %v359, 127
        %v565 = vpop.permute.xlu0 %564
        %566 = vrot.lane.b32.xlu0 %v360, 127
        %v567 = vpop.permute.xlu0 %566
        %568 = vrot.lane.b32.xlu0 %v361, 127
        %v569 = vpop.permute.xlu0 %568
        %570 = vrot.lane.b32.xlu0 %v362, 127
        %v571 = vpop.permute.xlu0 %570
        %572 = vrot.lane.b32.xlu0 %v363, 127
        %v573 = vpop.permute.xlu0 %572
        %574 = vrot.lane.b32.xlu0 %v364, 127
        %v575 = vpop.permute.xlu0 %574
        %vm576 = vcmask 1039360
        %v577 = vsel %vm576, %v561, %v563
        %v578 = vsel %vm576, %v565, %v567
        %v579 = vsel %vm576, %v569, %v571
        %v580 = vsel %vm576, %v573, %v575
        %v589 = vsel %vm576, %v563, 0.0
        %v590 = vsel %vm576, %v567, 0.0
        %v591 = vsel %vm576, %v571, 0.0
        %v592 = vsel %vm576, %v575, 0.0
        %v594 = vsel %vm409, %v559, 0
        %596 = vmatprep.subr.mxu0 %v589
        %597 = vmatpush1.msra.mxu0 %v577
        %598 = vmatprep.subr.mxu0 %v590
        %599 = vmatpush1.msra.mxu0 %v578
        %600 = vmatprep.subr.mxu0 %v591
        %601 = vmatpush1.msra.mxu0 %v579
        %602 = vmatprep.subr.mxu0 %v592
        %603 = vmatpush1.msra.mxu0 %v580
        %604 = vmatprep.subr.mxu0 0.0
        %605 = vmatpush1.msra.mxu0 0.0
        %606 = vmatprep.subr.mxu0 0.0
        %607 = vmatpush1.msra.mxu0 0.0
        %608 = vmatprep.subr.mxu0 0.0
        %609 = vmatpush1.msra.mxu0 0.0
        %610 = vmatprep.subr.mxu0 0.0
        %611 = vmatpush1.msra.mxu0 0.0
        %612 = vmatprep.subr.mxu0 0.0
        %613 = vmatpush1.msra.mxu0 0.0
        %614 = vmatprep.subr.mxu0 0.0
        %615 = vmatpush1.msra.mxu0 0.0
        %616 = vmatprep.subr.mxu0 0.0
        %617 = vmatpush1.msra.mxu0 0.0
        %618 = vmatprep.subr.mxu0 0.0
        %619 = vmatpush1.msra.mxu0 0.0
        %620 = vmatprep.subr.mxu0 0.0
        %621 = vmatpush1.msra.mxu0 0.0
        %622 = vmatprep.subr.mxu0 0.0
        %623 = vmatpush1.msra.mxu0 0.0
        %624 = vmatprep.subr.mxu0 0.0
        %625 = vmatpush1.msra.mxu0 0.0
        %626 = vmatprep.subr.mxu0 0.0
        %627 = vmatpush1.msra.mxu0 0.0
        %628 = vmatprep.subr.mxu0 0.0
        %629 = vmatpush1.msra.mxu0 0.0
        %630 = vmatprep.subr.mxu0 0.0
        %631 = vmatpush1.msra.mxu0 0.0
        %632 = vmatprep.subr.mxu0 0.0
        %633 = vmatpush1.msra.mxu0 0.0
        %634 = vmatprep.subr.mxu0 0.0
        %635 = vmatpush1.msra.mxu0 0.0
        %636 = vmatprep.subr.mxu0 0.0
        %637 = vmatpush1.msra.mxu0 0.0
        %638 = vmatprep.subr.mxu0 0.0
        %639 = vmatpush1.msra.mxu0 0.0
        %640 = vmatprep.subr.mxu0 0.0
        %641 = vmatpush1.msra.mxu0 0.0
        %642 = vmatprep.subr.mxu0 0.0
        %643 = vmatpush1.msra.mxu0 0.0
        %644 = vmatprep.subr.mxu0 0.0
        %645 = vmatpush1.msra.mxu0 0.0
        %646 = vmatprep.subr.mxu0 0.0
        %647 = vmatpush1.msra.mxu0 0.0
        %648 = vmatprep.subr.mxu0 0.0
        %649 = vmatpush1.msra.mxu0 0.0
        %650 = vmatprep.subr.mxu0 0.0
        %651 = vmatpush1.msra.mxu0 0.0
        %652 = vmatprep.subr.mxu0 0.0
        %653 = vmatpush1.msra.mxu0 0.0
        %654 = vmatprep.subr.mxu0 0.0
        %655 = vmatpush1.msra.mxu0 0.0
        %656 = vmatprep.subr.mxu0 0.0
        %657 = vmatpush1.msra.mxu0 0.0
        %658 = vmatprep.subr.mxu0 0.0
        %659 = vmatpush1.msra.mxu0 0.0
        %660 = vmatprep.mubr.f32.mxu0 0.0
        %661 = vmatmul.mubr.f32.gmra.mrb[0].mxu0 %v594
        %v662 = vpop.f32.mrb[0].mxu0
        %v663 = vadd.f32 0.0, %v662
        %v664 = vpop.f32.mrb[0].mxu0
        %v665 = vadd.f32 0.0, %v664
        %666 = vdwg.mxu0
        %v667 = vadd.f32 %v554, %v663
        %v668 = vadd.f32 %v556, %v665
        %v669 = vld [vmem:[%s2] sm:$0xf]
        %671 = vset.pattern.permute.xlu0 0
        %672 = vperm.xlu0 %671, %v669
        %v673 = vpop.permute.xlu0 %672
        %v675 = vadd.f32 %v667, %v673
        %v676 = vadd.f32 %v668, %v673
        %v677 = vmax.f32 %v675, 0.0
        %v678 = vmax.f32 %v676, 0.0
        %v679 = vld [vmem:[%s5] sm:$0x3]
        %v680 = vld [vmem:[%s6] sm:$0x3]
        %681 = vrot.lane.b32.xlu0 %v357, 17
        %v682 = vpop.permute.xlu0 %681
        %683 = vrot.lane.b32.xlu0 %v358, 17
        %v684 = vpop.permute.xlu0 %683
        %685 = vrot.lane.b32.xlu0 %v359, 17
        %v686 = vpop.permute.xlu0 %685
        %687 = vrot.lane.b32.xlu0 %v360, 17
        %v688 = vpop.permute.xlu0 %687
        %689 = vrot.lane.b32.xlu0 %v361, 17
        %v690 = vpop.permute.xlu0 %689
        %691 = vrot.lane.b32.xlu0 %v362, 17
        %v692 = vpop.permute.xlu0 %691
        %693 = vrot.lane.b32.xlu0 %v363, 17
        %v694 = vpop.permute.xlu0 %693
        %695 = vrot.lane.b32.xlu0 %v364, 17
        %v696 = vpop.permute.xlu0 %695
        %vm697 = vcmask 138240
        %v698 = vsel %vm697, %v682, %v684
        %v699 = vsel %vm697, %v686, %v688
        %v700 = vsel %vm697, %v690, %v692
        %v701 = vsel %vm697, %v694, %v696
        %v710 = vsel %vm697, 0.0, %v682
        %v711 = vsel %vm697, 0.0, %v686
        %v712 = vsel %vm697, 0.0, %v690
        %v713 = vsel %vm697, 0.0, %v694
        %v715 = vlaneseq
        %v716 = vshrl.u32 %v715, 7
        %v717 = vsub.s32 0, %v716
        %v718 = vrot.slane %v679, %v717
        %v719 = vlaneseq
        %v720 = vshrl.u32 %v719, 7
        %v721 = vsub.s32 1, %v720
        %v722 = vrot.slane %v679, %v721
        %v725 = vmul.f32 %v710, %v718
        %v726 = vmul.f32 %v698, %v722
        %v727 = vmul.f32 %v711, %v718
        %v728 = vmul.f32 %v699, %v722
        %v729 = vmul.f32 %v712, %v718
        %v730 = vmul.f32 %v700, %v722
        %v731 = vmul.f32 %v713, %v718
        %v732 = vmul.f32 %v701, %v722
        %v733 = vld [vmem:[%s3] sm:$0xf]
        %734 = vrot.lane.b32.xlu0 %v357, 16
        %v735 = vpop.permute.xlu0 %734
        %736 = vrot.lane.b32.xlu0 %v358, 16
        %v737 = vpop.permute.xlu0 %736
        %738 = vrot.lane.b32.xlu0 %v359, 16
        %v739 = vpop.permute.xlu0 %738
        %740 = vrot.lane.b32.xlu0 %v360, 16
        %v741 = vpop.permute.xlu0 %740
        %742 = vrot.lane.b32.xlu0 %v361, 16
        %v743 = vpop.permute.xlu0 %742
        %744 = vrot.lane.b32.xlu0 %v362, 16
        %v745 = vpop.permute.xlu0 %744
        %746 = vrot.lane.b32.xlu0 %v363, 16
        %v747 = vpop.permute.xlu0 %746
        %748 = vrot.lane.b32.xlu0 %v364, 16
        %v749 = vpop.permute.xlu0 %748
        %vm750 = vcmask 130048
        %v751 = vsel %vm750, %v735, %v737
        %v752 = vsel %vm750, %v739, %v741
        %v753 = vsel %vm750, %v743, %v745
        %v754 = vsel %vm750, %v747, %v749
        %v763 = vsel %vm750, 0.0, %v735
        %v764 = vsel %vm750, 0.0, %v739
        %v765 = vsel %vm750, 0.0, %v743
        %v766 = vsel %vm750, 0.0, %v747
        %s767 = scalar_lea.vmem %s3, 4
        %v768 = vld [vmem:[%s767] sm:$0xf]
        %v770 = vsel %vm409, %v768, 0
        %772 = vmatprep.subr.mxu0 %v751
        %773 = vmatpush1.msra.mxu0 %v763
        %774 = vmatprep.subr.mxu0 %v752
        %775 = vmatpush1.msra.mxu0 %v764
        %776 = vmatprep.subr.mxu0 %v753
        %777 = vmatpush1.msra.mxu0 %v765
        %778 = vmatprep.subr.mxu0 %v754
        %779 = vmatpush1.msra.mxu0 %v766
        %780 = vmatprep.subr.mxu0 0.0
        %781 = vmatpush1.msra.mxu0 0.0
        %782 = vmatprep.subr.mxu0 0.0
        %783 = vmatpush1.msra.mxu0 0.0
        %784 = vmatprep.subr.mxu0 0.0
        %785 = vmatpush1.msra.mxu0 0.0
        %786 = vmatprep.subr.mxu0 0.0
        %787 = vmatpush1.msra.mxu0 0.0
        %788 = vmatprep.subr.mxu0 0.0
        %789 = vmatpush1.msra.mxu0 0.0
        %790 = vmatprep.subr.mxu0 0.0
        %791 = vmatpush1.msra.mxu0 0.0
        %792 = vmatprep.subr.mxu0 0.0
        %793 = vmatpush1.msra.mxu0 0.0
        %794 = vmatprep.subr.mxu0 0.0
        %795 = vmatpush1.msra.mxu0 0.0
        %796 = vmatprep.subr.mxu0 0.0
        %797 = vmatpush1.msra.mxu0 0.0
        %798 = vmatprep.subr.mxu0 0.0
        %799 = vmatpush1.msra.mxu0 0.0
        %800 = vmatprep.subr.mxu0 0.0
        %801 = vmatpush1.msra.mxu0 0.0
        %802 = vmatprep.subr.mxu0 0.0
        %803 = vmatpush1.msra.mxu0 0.0
        %804 = vmatprep.subr.mxu0 0.0
        %805 = vmatpush1.msra.mxu0 0.0
        %806 = vmatprep.subr.mxu0 0.0
        %807 = vmatpush1.msra.mxu0 0.0
        %808 = vmatprep.subr.mxu0 0.0
        %809 = vmatpush1.msra.mxu0 0.0
        %810 = vmatprep.subr.mxu0 0.0
        %811 = vmatpush1.msra.mxu0 0.0
        %812 = vmatprep.subr.mxu0 0.0
        %813 = vmatpush1.msra.mxu0 0.0
        %814 = vmatprep.subr.mxu0 0.0
        %815 = vmatpush1.msra.mxu0 0.0
        %816 = vmatprep.subr.mxu0 0.0
        %817 = vmatpush1.msra.mxu0 0.0
        %818 = vmatprep.subr.mxu0 0.0
        %819 = vmatpush1.msra.mxu0 0.0
        %820 = vmatprep.subr.mxu0 0.0
        %821 = vmatpush1.msra.mxu0 0.0
        %822 = vmatprep.subr.mxu0 0.0
        %823 = vmatpush1.msra.mxu0 0.0
        %824 = vmatprep.subr.mxu0 0.0
        %825 = vmatpush1.msra.mxu0 0.0
        %826 = vmatprep.subr.mxu0 0.0
        %827 = vmatpush1.msra.mxu0 0.0
        %828 = vmatprep.subr.mxu0 0.0
        %829 = vmatpush1.msra.mxu0 0.0
        %830 = vmatprep.subr.mxu0 0.0
        %831 = vmatpush1.msra.mxu0 0.0
        %832 = vmatprep.subr.mxu0 0.0
        %833 = vmatpush1.msra.mxu0 0.0
        %834 = vmatprep.subr.mxu0 0.0
        %835 = vmatpush1.msra.mxu0 0.0
        %836 = vmatprep.mubr.f32.mxu0 0.0
        %837 = vmatmul.mubr.f32.gmra.mrb[0].mxu0 %v770
        %v838 = vpop.f32.mrb[0].mxu0
        %v839 = vadd.f32 0.0, %v838
        %v840 = vpop.f32.mrb[0].mxu0
        %v841 = vadd.f32 0.0, %v840
        %842 = vdwg.mxu0
        %v844 = vsel %vm409, %v733, 0
        %846 = vmatprep.subr.mxu0 %v726
        %847 = vmatpush1.msra.mxu0 %v725
        %848 = vmatprep.subr.mxu0 %v728
        %849 = vmatpush1.msra.mxu0 %v727
        %850 = vmatprep.subr.mxu0 %v730
        %851 = vmatpush1.msra.mxu0 %v729
        %852 = vmatprep.subr.mxu0 %v732
        %853 = vmatpush1.msra.mxu0 %v731
        %854 = vmatprep.subr.mxu0 0.0
        %855 = vmatpush1.msra.mxu0 0.0
        %856 = vmatprep.subr.mxu0 0.0
        %857 = vmatpush1.msra.mxu0 0.0
        %858 = vmatprep.subr.mxu0 0.0
        %859 = vmatpush1.msra.mxu0 0.0
        %860 = vmatprep.subr.mxu0 0.0
        %861 = vmatpush1.msra.mxu0 0.0
        %862 = vmatprep.subr.mxu0 0.0
        %863 = vmatpush1.msra.mxu0 0.0
        %864 = vmatprep.subr.mxu0 0.0
        %865 = vmatpush1.msra.mxu0 0.0
        %866 = vmatprep.subr.mxu0 0.0
        %867 = vmatpush1.msra.mxu0 0.0
        %868 = vmatprep.subr.mxu0 0.0
        %869 = vmatpush1.msra.mxu0 0.0
        %870 = vmatprep.subr.mxu0 0.0
        %871 = vmatpush1.msra.mxu0 0.0
        %872 = vmatprep.subr.mxu0 0.0
        %873 = vmatpush1.msra.mxu0 0.0
        %874 = vmatprep.subr.mxu0 0.0
        %875 = vmatpush1.msra.mxu0 0.0
        %876 = vmatprep.subr.mxu0 0.0
        %877 = vmatpush1.msra.mxu0 0.0
        %878 = vmatprep.subr.mxu0 0.0
        %879 = vmatpush1.msra.mxu0 0.0
        %880 = vmatprep.subr.mxu0 0.0
        %881 = vmatpush1.msra.mxu0 0.0
        %882 = vmatprep.subr.mxu0 0.0
        %883 = vmatpush1.msra.mxu0 0.0
        %884 = vmatprep.subr.mxu0 0.0
        %885 = vmatpush1.msra.mxu0 0.0
        %886 = vmatprep.subr.mxu0 0.0
        %887 = vmatpush1.msra.mxu0 0.0
        %888 = vmatprep.subr.mxu0 0.0
        %889 = vmatpush1.msra.mxu0 0.0
        %890 = vmatprep.subr.mxu0 0.0
        %891 = vmatpush1.msra.mxu0 0.0
        %892 = vmatprep.subr.mxu0 0.0
        %893 = vmatpush1.msra.mxu0 0.0
        %894 = vmatprep.subr.mxu0 0.0
        %895 = vmatpush1.msra.mxu0 0.0
        %896 = vmatprep.subr.mxu0 0.0
        %897 = vmatpush1.msra.mxu0 0.0
        %898 = vmatprep.subr.mxu0 0.0
        %899 = vmatpush1.msra.mxu0 0.0
        %900 = vmatprep.subr.mxu0 0.0
        %901 = vmatpush1.msra.mxu0 0.0
        %902 = vmatprep.subr.mxu0 0.0
        %903 = vmatpush1.msra.mxu0 0.0
        %904 = vmatprep.subr.mxu0 0.0
        %905 = vmatpush1.msra.mxu0 0.0
        %906 = vmatprep.subr.mxu0 0.0
        %907 = vmatpush1.msra.mxu0 0.0
        %908 = vmatprep.subr.mxu0 0.0
        %909 = vmatpush1.msra.mxu0 0.0
        %910 = vmatprep.mubr.f32.mxu0 0.0
        %911 = vmatmul.mubr.f32.gmra.mrb[0].mxu0 %v844
        %v912 = vpop.f32.mrb[0].mxu0
        %v913 = vadd.f32 %v839, %v912
        %v914 = vpop.f32.mrb[0].mxu0
        %v915 = vadd.f32 %v841, %v914
        %916 = vdwg.mxu0
        %917 = vrot.lane.b32.xlu0 %v357, 15
        %v918 = vpop.permute.xlu0 %917
        %919 = vrot.lane.b32.xlu0 %v358, 15
        %v920 = vpop.permute.xlu0 %919
        %921 = vrot.lane.b32.xlu0 %v359, 15
        %v922 = vpop.permute.xlu0 %921
        %923 = vrot.lane.b32.xlu0 %v360, 15
        %v924 = vpop.permute.xlu0 %923
        %925 = vrot.lane.b32.xlu0 %v361, 15
        %v926 = vpop.permute.xlu0 %925
        %927 = vrot.lane.b32.xlu0 %v362, 15
        %v928 = vpop.permute.xlu0 %927
        %929 = vrot.lane.b32.xlu0 %v363, 15
        %v930 = vpop.permute.xlu0 %929
        %931 = vrot.lane.b32.xlu0 %v364, 15
        %v932 = vpop.permute.xlu0 %931
        %vm933 = vcmask 121856
        %v934 = vsel %vm933, %v918, %v920
        %v935 = vsel %vm933, %v922, %v924
        %v936 = vsel %vm933, %v926, %v928
        %v937 = vsel %vm933, %v930, %v932
        %v946 = vsel %vm933, 0.0, %v918
        %v947 = vsel %vm933, 0.0, %v922
        %v948 = vsel %vm933, 0.0, %v926
        %v949 = vsel %vm933, 0.0, %v930
        %v951 = vlaneseq
        %v952 = vshrl.u32 %v951, 7
        %v953 = vsub.s32 0, %v952
        %v954 = vrot.slane %v680, %v953
        %v955 = vlaneseq
        %v956 = vshrl.u32 %v955, 7
        %v957 = vsub.s32 1, %v956
        %v958 = vrot.slane %v680, %v957
        %v961 = vmul.f32 %v946, %v954
        %v962 = vmul.f32 %v934, %v958
        %v963 = vmul.f32 %v947, %v954
        %v964 = vmul.f32 %v935, %v958
        %v965 = vmul.f32 %v948, %v954
        %v966 = vmul.f32 %v936, %v958
        %v967 = vmul.f32 %v949, %v954
        %v968 = vmul.f32 %v937, %v958
        %s969 = scalar_lea.vmem %s3, 8
        %v970 = vld [vmem:[%s969] sm:$0xf]
        %v972 = vsel %vm409, %v970, 0
        %974 = vmatprep.subr.mxu0 %v962
        %975 = vmatpush1.msra.mxu0 %v961
        %976 = vmatprep.subr.mxu0 %v964
        %977 = vmatpush1.msra.mxu0 %v963
        %978 = vmatprep.subr.mxu0 %v966
        %979 = vmatpush1.msra.mxu0 %v965
        %980 = vmatprep.subr.mxu0 %v968
        %981 = vmatpush1.msra.mxu0 %v967
        %982 = vmatprep.subr.mxu0 0.0
        %983 = vmatpush1.msra.mxu0 0.0
        %984 = vmatprep.subr.mxu0 0.0
        %985 = vmatpush1.msra.mxu0 0.0
        %986 = vmatprep.subr.mxu0 0.0
        %987 = vmatpush1.msra.mxu0 0.0
        %988 = vmatprep.subr.mxu0 0.0
        %989 = vmatpush1.msra.mxu0 0.0
        %990 = vmatprep.subr.mxu0 0.0
        %991 = vmatpush1.msra.mxu0 0.0
        %992 = vmatprep.subr.mxu0 0.0
        %993 = vmatpush1.msra.mxu0 0.0
        %994 = vmatprep.subr.mxu0 0.0
        %995 = vmatpush1.msra.mxu0 0.0
        %996 = vmatprep.subr.mxu0 0.0
        %997 = vmatpush1.msra.mxu0 0.0
        %998 = vmatprep.subr.mxu0 0.0
        %999 = vmatpush1.msra.mxu0 0.0
        %1000 = vmatprep.subr.mxu0 0.0
        %1001 = vmatpush1.msra.mxu0 0.0
        %1002 = vmatprep.subr.mxu0 0.0
        %1003 = vmatpush1.msra.mxu0 0.0
        %1004 = vmatprep.subr.mxu0 0.0
        %1005 = vmatpush1.msra.mxu0 0.0
        %1006 = vmatprep.subr.mxu0 0.0
        %1007 = vmatpush1.msra.mxu0 0.0
        %1008 = vmatprep.subr.mxu0 0.0
        %1009 = vmatpush1.msra.mxu0 0.0
        %1010 = vmatprep.subr.mxu0 0.0
        %1011 = vmatpush1.msra.mxu0 0.0
        %1012 = vmatprep.subr.mxu0 0.0
        %1013 = vmatpush1.msra.mxu0 0.0
        %1014 = vmatprep.subr.mxu0 0.0
        %1015 = vmatpush1.msra.mxu0 0.0
        %1016 = vmatprep.subr.mxu0 0.0
        %1017 = vmatpush1.msra.mxu0 0.0
        %1018 = vmatprep.subr.mxu0 0.0
        %1019 = vmatpush1.msra.mxu0 0.0
        %1020 = vmatprep.subr.mxu0 0.0
        %1021 = vmatpush1.msra.mxu0 0.0
        %1022 = vmatprep.subr.mxu0 0.0
        %1023 = vmatpush1.msra.mxu0 0.0
        %1024 = vmatprep.subr.mxu0 0.0
        %1025 = vmatpush1.msra.mxu0 0.0
        %1026 = vmatprep.subr.mxu0 0.0
        %1027 = vmatpush1.msra.mxu0 0.0
        %1028 = vmatprep.subr.mxu0 0.0
        %1029 = vmatpush1.msra.mxu0 0.0
        %1030 = vmatprep.subr.mxu0 0.0
        %1031 = vmatpush1.msra.mxu0 0.0
        %1032 = vmatprep.subr.mxu0 0.0
        %1033 = vmatpush1.msra.mxu0 0.0
        %1034 = vmatprep.subr.mxu0 0.0
        %1035 = vmatpush1.msra.mxu0 0.0
        %1036 = vmatprep.subr.mxu0 0.0
        %1037 = vmatpush1.msra.mxu0 0.0
        %1038 = vmatprep.mubr.f32.mxu0 0.0
        %1039 = vmatmul.mubr.f32.gmra.mrb[0].mxu0 %v972
        %v1040 = vpop.f32.mrb[0].mxu0
        %v1041 = vadd.f32 0.0, %v1040
        %v1042 = vpop.f32.mrb[0].mxu0
        %v1043 = vadd.f32 0.0, %v1042
        %1044 = vdwg.mxu0
        %v1045 = vadd.f32 %v913, %v1041
        %v1046 = vadd.f32 %v915, %v1043
        %v1047 = vmul.f32 %v403, %v718
        %v1048 = vmul.f32 %v391, %v722
        %v1049 = vmul.f32 %v404, %v718
        %v1050 = vmul.f32 %v392, %v722
        %v1051 = vmul.f32 %v405, %v718
        %v1052 = vmul.f32 %v393, %v722
        %v1053 = vmul.f32 %v406, %v718
        %v1054 = vmul.f32 %v394, %v722
        %s1055 = scalar_lea.vmem %s3, 12
        %v1056 = vld [vmem:[%s1055] sm:$0xf]
        %v1058 = vsel %vm409, %v1056, 0
        %1060 = vmatprep.subr.mxu0 %v1048
        %1061 = vmatpush1.msra.mxu0 %v1047
        %1062 = vmatprep.subr.mxu0 %v1050
        %1063 = vmatpush1.msra.mxu0 %v1049
        %1064 = vmatprep.subr.mxu0 %v1052
        %1065 = vmatpush1.msra.mxu0 %v1051
        %1066 = vmatprep.subr.mxu0 %v1054
        %1067 = vmatpush1.msra.mxu0 %v1053
        %1068 = vmatprep.subr.mxu0 0.0
        %1069 = vmatpush1.msra.mxu0 0.0
        %1070 = vmatprep.subr.mxu0 0.0
        %1071 = vmatpush1.msra.mxu0 0.0
        %1072 = vmatprep.subr.mxu0 0.0
        %1073 = vmatpush1.msra.mxu0 0.0
        %1074 = vmatprep.subr.mxu0 0.0
        %1075 = vmatpush1.msra.mxu0 0.0
        %1076 = vmatprep.subr.mxu0 0.0
        %1077 = vmatpush1.msra.mxu0 0.0
        %1078 = vmatprep.subr.mxu0 0.0
        %1079 = vmatpush1.msra.mxu0 0.0
        %1080 = vmatprep.subr.mxu0 0.0
        %1081 = vmatpush1.msra.mxu0 0.0
        %1082 = vmatprep.subr.mxu0 0.0
        %1083 = vmatpush1.msra.mxu0 0.0
        %1084 = vmatprep.subr.mxu0 0.0
        %1085 = vmatpush1.msra.mxu0 0.0
        %1086 = vmatprep.subr.mxu0 0.0
        %1087 = vmatpush1.msra.mxu0 0.0
        %1088 = vmatprep.subr.mxu0 0.0
        %1089 = vmatpush1.msra.mxu0 0.0
        %1090 = vmatprep.subr.mxu0 0.0
        %1091 = vmatpush1.msra.mxu0 0.0
        %1092 = vmatprep.subr.mxu0 0.0
        %1093 = vmatpush1.msra.mxu0 0.0
        %1094 = vmatprep.subr.mxu0 0.0
        %1095 = vmatpush1.msra.mxu0 0.0
        %1096 = vmatprep.subr.mxu0 0.0
        %1097 = vmatpush1.msra.mxu0 0.0
        %1098 = vmatprep.subr.mxu0 0.0
        %1099 = vmatpush1.msra.mxu0 0.0
        %1100 = vmatprep.subr.mxu0 0.0
        %1101 = vmatpush1.msra.mxu0 0.0
        %1102 = vmatprep.subr.mxu0 0.0
        %1103 = vmatpush1.msra.mxu0 0.0
        %1104 = vmatprep.subr.mxu0 0.0
        %1105 = vmatpush1.msra.mxu0 0.0
        %1106 = vmatprep.subr.mxu0 0.0
        %1107 = vmatpush1.msra.mxu0 0.0
        %1108 = vmatprep.subr.mxu0 0.0
        %1109 = vmatpush1.msra.mxu0 0.0
        %1110 = vmatprep.subr.mxu0 0.0
        %1111 = vmatpush1.msra.mxu0 0.0
        %1112 = vmatprep.subr.mxu0 0.0
        %1113 = vmatpush1.msra.mxu0 0.0
        %1114 = vmatprep.subr.mxu0 0.0
        %1115 = vmatpush1.msra.mxu0 0.0
        %1116 = vmatprep.subr.mxu0 0.0
        %1117 = vmatpush1.msra.mxu0 0.0
        %1118 = vmatprep.subr.mxu0 0.0
        %1119 = vmatpush1.msra.mxu0 0.0
        %1120 = vmatprep.subr.mxu0 0.0
        %1121 = vmatpush1.msra.mxu0 0.0
        %1122 = vmatprep.subr.mxu0 0.0
        %1123 = vmatpush1.msra.mxu0 0.0
        %1124 = vmatprep.mubr.f32.mxu0 0.0
        %1125 = vmatmul.mubr.f32.gmra.mrb[0].mxu0 %v1058
        %v1126 = vpop.f32.mrb[0].mxu0
        %v1127 = vadd.f32 0.0, %v1126
        %v1128 = vpop.f32.mrb[0].mxu0
        %v1129 = vadd.f32 0.0, %v1128
        %1130 = vdwg.mxu0
        %v1131 = vadd.f32 %v1045, %v1127
        %v1132 = vadd.f32 %v1046, %v1129
        %s1133 = scalar_lea.vmem %s3, 16
        %v1134 = vld [vmem:[%s1133] sm:$0xf]
        %v1136 = vsel %vm409, %v1134, 0
        %1138 = vmatprep.subr.mxu0 %v358
        %1139 = vmatpush1.msra.mxu0 %v357
        %1140 = vmatprep.subr.mxu0 %v360
        %1141 = vmatpush1.msra.mxu0 %v359
        %1142 = vmatprep.subr.mxu0 %v362
        %1143 = vmatpush1.msra.mxu0 %v361
        %1144 = vmatprep.subr.mxu0 %v364
        %1145 = vmatpush1.msra.mxu0 %v363
        %1146 = vmatprep.subr.mxu0 0.0
        %1147 = vmatpush1.msra.mxu0 0.0
        %1148 = vmatprep.subr.mxu0 0.0
        %1149 = vmatpush1.msra.mxu0 0.0
        %1150 = vmatprep.subr.mxu0 0.0
        %1151 = vmatpush1.msra.mxu0 0.0
        %1152 = vmatprep.subr.mxu0 0.0
        %1153 = vmatpush1.msra.mxu0 0.0
        %1154 = vmatprep.subr.mxu0 0.0
        %1155 = vmatpush1.msra.mxu0 0.0
        %1156 = vmatprep.subr.mxu0 0.0
        %1157 = vmatpush1.msra.mxu0 0.0
        %1158 = vmatprep.subr.mxu0 0.0
        %1159 = vmatpush1.msra.mxu0 0.0
        %1160 = vmatprep.subr.mxu0 0.0
        %1161 = vmatpush1.msra.mxu0 0.0
        %1162 = vmatprep.subr.mxu0 0.0
        %1163 = vmatpush1.msra.mxu0 0.0
        %1164 = vmatprep.subr.mxu0 0.0
        %1165 = vmatpush1.msra.mxu0 0.0
        %1166 = vmatprep.subr.mxu0 0.0
        %1167 = vmatpush1.msra.mxu0 0.0
        %1168 = vmatprep.subr.mxu0 0.0
        %1169 = vmatpush1.msra.mxu0 0.0
        %1170 = vmatprep.subr.mxu0 0.0
        %1171 = vmatpush1.msra.mxu0 0.0
        %1172 = vmatprep.subr.mxu0 0.0
        %1173 = vmatpush1.msra.mxu0 0.0
        %1174 = vmatprep.subr.mxu0 0.0
        %1175 = vmatpush1.msra.mxu0 0.0
        %1176 = vmatprep.subr.mxu0 0.0
        %1177 = vmatpush1.msra.mxu0 0.0
        %1178 = vmatprep.subr.mxu0 0.0
        %1179 = vmatpush1.msra.mxu0 0.0
        %1180 = vmatprep.subr.mxu0 0.0
        %1181 = vmatpush1.msra.mxu0 0.0
        %1182 = vmatprep.subr.mxu0 0.0
        %1183 = vmatpush1.msra.mxu0 0.0
        %1184 = vmatprep.subr.mxu0 0.0
        %1185 = vmatpush1.msra.mxu0 0.0
        %1186 = vmatprep.subr.mxu0 0.0
        %1187 = vmatpush1.msra.mxu0 0.0
        %1188 = vmatprep.subr.mxu0 0.0
        %1189 = vmatpush1.msra.mxu0 0.0
        %1190 = vmatprep.subr.mxu0 0.0
        %1191 = vmatpush1.msra.mxu0 0.0
        %1192 = vmatprep.subr.mxu0 0.0
        %1193 = vmatpush1.msra.mxu0 0.0
        %1194 = vmatprep.subr.mxu0 0.0
        %1195 = vmatpush1.msra.mxu0 0.0
        %1196 = vmatprep.subr.mxu0 0.0
        %1197 = vmatpush1.msra.mxu0 0.0
        %1198 = vmatprep.subr.mxu0 0.0
        %1199 = vmatpush1.msra.mxu0 0.0
        %1200 = vmatprep.subr.mxu0 0.0
        %1201 = vmatpush1.msra.mxu0 0.0
        %1202 = vmatprep.mubr.f32.mxu0 0.0
        %1203 = vmatmul.mubr.f32.gmra.mrb[0].mxu0 %v1136
        %v1204 = vpop.f32.mrb[0].mxu0
        %v1205 = vadd.f32 0.0, %v1204
        %v1206 = vpop.f32.mrb[0].mxu0
        %v1207 = vadd.f32 0.0, %v1206
        %1208 = vdwg.mxu0
        %v1209 = vadd.f32 %v1131, %v1205
        %v1210 = vadd.f32 %v1132, %v1207
        %v1211 = vmul.f32 %v577, %v954
        %v1212 = vmul.f32 %v589, %v958
        %v1213 = vmul.f32 %v578, %v954
        %v1214 = vmul.f32 %v590, %v958
        %v1215 = vmul.f32 %v579, %v954
        %v1216 = vmul.f32 %v591, %v958
        %v1217 = vmul.f32 %v580, %v954
        %v1218 = vmul.f32 %v592, %v958
        %s1219 = scalar_lea.vmem %s3, 20
        %v1220 = vld [vmem:[%s1219] sm:$0xf]
        %v1222 = vsel %vm409, %v1220, 0
        %1224 = vmatprep.subr.mxu0 %v1212
        %1225 = vmatpush1.msra.mxu0 %v1211
        %1226 = vmatprep.subr.mxu0 %v1214
        %1227 = vmatpush1.msra.mxu0 %v1213
        %1228 = vmatprep.subr.mxu0 %v1216
        %1229 = vmatpush1.msra.mxu0 %v1215
        %1230 = vmatprep.subr.mxu0 %v1218
        %1231 = vmatpush1.msra.mxu0 %v1217
        %1232 = vmatprep.subr.mxu0 0.0
        %1233 = vmatpush1.msra.mxu0 0.0
        %1234 = vmatprep.subr.mxu0 0.0
        %1235 = vmatpush1.msra.mxu0 0.0
        %1236 = vmatprep.subr.mxu0 0.0
        %1237 = vmatpush1.msra.mxu0 0.0
        %1238 = vmatprep.subr.mxu0 0.0
        %1239 = vmatpush1.msra.mxu0 0.0
        %1240 = vmatprep.subr.mxu0 0.0
        %1241 = vmatpush1.msra.mxu0 0.0
        %1242 = vmatprep.subr.mxu0 0.0
        %1243 = vmatpush1.msra.mxu0 0.0
        %1244 = vmatprep.subr.mxu0 0.0
        %1245 = vmatpush1.msra.mxu0 0.0
        %1246 = vmatprep.subr.mxu0 0.0
        %1247 = vmatpush1.msra.mxu0 0.0
        %1248 = vmatprep.subr.mxu0 0.0
        %1249 = vmatpush1.msra.mxu0 0.0
        %1250 = vmatprep.subr.mxu0 0.0
        %1251 = vmatpush1.msra.mxu0 0.0
        %1252 = vmatprep.subr.mxu0 0.0
        %1253 = vmatpush1.msra.mxu0 0.0
        %1254 = vmatprep.subr.mxu0 0.0
        %1255 = vmatpush1.msra.mxu0 0.0
        %1256 = vmatprep.subr.mxu0 0.0
        %1257 = vmatpush1.msra.mxu0 0.0
        %1258 = vmatprep.subr.mxu0 0.0
        %1259 = vmatpush1.msra.mxu0 0.0
        %1260 = vmatprep.subr.mxu0 0.0
        %1261 = vmatpush1.msra.mxu0 0.0
        %1262 = vmatprep.subr.mxu0 0.0
        %1263 = vmatpush1.msra.mxu0 0.0
        %1264 = vmatprep.subr.mxu0 0.0
        %1265 = vmatpush1.msra.mxu0 0.0
        %1266 = vmatprep.subr.mxu0 0.0
        %1267 = vmatpush1.msra.mxu0 0.0
        %1268 = vmatprep.subr.mxu0 0.0
        %1269 = vmatpush1.msra.mxu0 0.0
        %1270 = vmatprep.subr.mxu0 0.0
        %1271 = vmatpush1.msra.mxu0 0.0
        %1272 = vmatprep.subr.mxu0 0.0
        %1273 = vmatpush1.msra.mxu0 0.0
        %1274 = vmatprep.subr.mxu0 0.0
        %1275 = vmatpush1.msra.mxu0 0.0
        %1276 = vmatprep.subr.mxu0 0.0
        %1277 = vmatpush1.msra.mxu0 0.0
        %1278 = vmatprep.subr.mxu0 0.0
        %1279 = vmatpush1.msra.mxu0 0.0
        %1280 = vmatprep.subr.mxu0 0.0
        %1281 = vmatpush1.msra.mxu0 0.0
        %1282 = vmatprep.subr.mxu0 0.0
        %1283 = vmatpush1.msra.mxu0 0.0
        %1284 = vmatprep.subr.mxu0 0.0
        %1285 = vmatpush1.msra.mxu0 0.0
        %1286 = vmatprep.subr.mxu0 0.0
        %1287 = vmatpush1.msra.mxu0 0.0
        %1288 = vmatprep.mubr.f32.mxu0 0.0
        %1289 = vmatmul.mubr.f32.gmra.mrb[0].mxu0 %v1222
        %v1290 = vpop.f32.mrb[0].mxu0
        %v1291 = vadd.f32 0.0, %v1290
        %v1292 = vpop.f32.mrb[0].mxu0
        %v1293 = vadd.f32 0.0, %v1292
        %1294 = vdwg.mxu0
        %v1295 = vadd.f32 %v1209, %v1291
        %v1296 = vadd.f32 %v1210, %v1293
        %1297 = vrot.lane.b32.xlu0 %v357, 113
        %v1298 = vpop.permute.xlu0 %1297
        %1299 = vrot.lane.b32.xlu0 %v358, 113
        %v1300 = vpop.permute.xlu0 %1299
        %1301 = vrot.lane.b32.xlu0 %v359, 113
        %v1302 = vpop.permute.xlu0 %1301
        %1303 = vrot.lane.b32.xlu0 %v360, 113
        %v1304 = vpop.permute.xlu0 %1303
        %1305 = vrot.lane.b32.xlu0 %v361, 113
        %v1306 = vpop.permute.xlu0 %1305
        %1307 = vrot.lane.b32.xlu0 %v362, 113
        %v1308 = vpop.permute.xlu0 %1307
        %1309 = vrot.lane.b32.xlu0 %v363, 113
        %v1310 = vpop.permute.xlu0 %1309
        %1311 = vrot.lane.b32.xlu0 %v364, 113
        %v1312 = vpop.permute.xlu0 %1311
        %vm1313 = vcmask 924672
        %v1314 = vsel %vm1313, %v1298, %v1300
        %v1315 = vsel %vm1313, %v1302, %v1304
        %v1316 = vsel %vm1313, %v1306, %v1308
        %v1317 = vsel %vm1313, %v1310, %v1312
        %v1326 = vsel %vm1313, %v1300, 0.0
        %v1327 = vsel %vm1313, %v1304, 0.0
        %v1328 = vsel %vm1313, %v1308, 0.0
        %v1329 = vsel %vm1313, %v1312, 0.0
        %v1330 = vmul.f32 %v1314, %v718
        %v1331 = vmul.f32 %v1326, %v722
        %v1332 = vmul.f32 %v1315, %v718
        %v1333 = vmul.f32 %v1327, %v722
        %v1334 = vmul.f32 %v1316, %v718
        %v1335 = vmul.f32 %v1328, %v722
        %v1336 = vmul.f32 %v1317, %v718
        %v1337 = vmul.f32 %v1329, %v722
        %s1338 = scalar_lea.vmem %s3, 24
        %v1339 = vld [vmem:[%s1338] sm:$0xf]
        %v1341 = vsel %vm409, %v1339, 0
        %1343 = vmatprep.subr.mxu0 %v1331
        %1344 = vmatpush1.msra.mxu0 %v1330
        %1345 = vmatprep.subr.mxu0 %v1333
        %1346 = vmatpush1.msra.mxu0 %v1332
        %1347 = vmatprep.subr.mxu0 %v1335
        %1348 = vmatpush1.msra.mxu0 %v1334
        %1349 = vmatprep.subr.mxu0 %v1337
        %1350 = vmatpush1.msra.mxu0 %v1336
        %1351 = vmatprep.subr.mxu0 0.0
        %1352 = vmatpush1.msra.mxu0 0.0
        %1353 = vmatprep.subr.mxu0 0.0
        %1354 = vmatpush1.msra.mxu0 0.0
        %1355 = vmatprep.subr.mxu0 0.0
        %1356 = vmatpush1.msra.mxu0 0.0
        %1357 = vmatprep.subr.mxu0 0.0
        %1358 = vmatpush1.msra.mxu0 0.0
        %1359 = vmatprep.subr.mxu0 0.0
        %1360 = vmatpush1.msra.mxu0 0.0
        %1361 = vmatprep.subr.mxu0 0.0
        %1362 = vmatpush1.msra.mxu0 0.0
        %1363 = vmatprep.subr.mxu0 0.0
        %1364 = vmatpush1.msra.mxu0 0.0
        %1365 = vmatprep.subr.mxu0 0.0
        %1366 = vmatpush1.msra.mxu0 0.0
        %1367 = vmatprep.subr.mxu0 0.0
        %1368 = vmatpush1.msra.mxu0 0.0
        %1369 = vmatprep.subr.mxu0 0.0
        %1370 = vmatpush1.msra.mxu0 0.0
        %1371 = vmatprep.subr.mxu0 0.0
        %1372 = vmatpush1.msra.mxu0 0.0
        %1373 = vmatprep.subr.mxu0 0.0
        %1374 = vmatpush1.msra.mxu0 0.0
        %1375 = vmatprep.subr.mxu0 0.0
        %1376 = vmatpush1.msra.mxu0 0.0
        %1377 = vmatprep.subr.mxu0 0.0
        %1378 = vmatpush1.msra.mxu0 0.0
        %1379 = vmatprep.subr.mxu0 0.0
        %1380 = vmatpush1.msra.mxu0 0.0
        %1381 = vmatprep.subr.mxu0 0.0
        %1382 = vmatpush1.msra.mxu0 0.0
        %1383 = vmatprep.subr.mxu0 0.0
        %1384 = vmatpush1.msra.mxu0 0.0
        %1385 = vmatprep.subr.mxu0 0.0
        %1386 = vmatpush1.msra.mxu0 0.0
        %1387 = vmatprep.subr.mxu0 0.0
        %1388 = vmatpush1.msra.mxu0 0.0
        %1389 = vmatprep.subr.mxu0 0.0
        %1390 = vmatpush1.msra.mxu0 0.0
        %1391 = vmatprep.subr.mxu0 0.0
        %1392 = vmatpush1.msra.mxu0 0.0
        %1393 = vmatprep.subr.mxu0 0.0
        %1394 = vmatpush1.msra.mxu0 0.0
        %1395 = vmatprep.subr.mxu0 0.0
        %1396 = vmatpush1.msra.mxu0 0.0
        %1397 = vmatprep.subr.mxu0 0.0
        %1398 = vmatpush1.msra.mxu0 0.0
        %1399 = vmatprep.subr.mxu0 0.0
        %1400 = vmatpush1.msra.mxu0 0.0
        %1401 = vmatprep.subr.mxu0 0.0
        %1402 = vmatpush1.msra.mxu0 0.0
        %1403 = vmatprep.subr.mxu0 0.0
        %1404 = vmatpush1.msra.mxu0 0.0
        %1405 = vmatprep.subr.mxu0 0.0
        %1406 = vmatpush1.msra.mxu0 0.0
        %1407 = vmatprep.mubr.f32.mxu0 0.0
        %1408 = vmatmul.mubr.f32.gmra.mrb[0].mxu0 %v1341
        %v1409 = vpop.f32.mrb[0].mxu0
        %v1410 = vadd.f32 0.0, %v1409
        %v1411 = vpop.f32.mrb[0].mxu0
        %v1412 = vadd.f32 0.0, %v1411
        %1413 = vdwg.mxu0
        %v1414 = vadd.f32 %v1295, %v1410
        %v1415 = vadd.f32 %v1296, %v1412
        %1416 = vrot.lane.b32.xlu0 %v357, 112
        %v1417 = vpop.permute.xlu0 %1416
        %1418 = vrot.lane.b32.xlu0 %v358, 112
        %v1419 = vpop.permute.xlu0 %1418
        %1420 = vrot.lane.b32.xlu0 %v359, 112
        %v1421 = vpop.permute.xlu0 %1420
        %1422 = vrot.lane.b32.xlu0 %v360, 112
        %v1423 = vpop.permute.xlu0 %1422
        %1424 = vrot.lane.b32.xlu0 %v361, 112
        %v1425 = vpop.permute.xlu0 %1424
        %1426 = vrot.lane.b32.xlu0 %v362, 112
        %v1427 = vpop.permute.xlu0 %1426
        %1428 = vrot.lane.b32.xlu0 %v363, 112
        %v1429 = vpop.permute.xlu0 %1428
        %1430 = vrot.lane.b32.xlu0 %v364, 112
        %v1431 = vpop.permute.xlu0 %1430
        %vm1432 = vcmask 916480
        %v1433 = vsel %vm1432, %v1417, %v1419
        %v1434 = vsel %vm1432, %v1421, %v1423
        %v1435 = vsel %vm1432, %v1425, %v1427
        %v1436 = vsel %vm1432, %v1429, %v1431
        %v1445 = vsel %vm1432, %v1419, 0.0
        %v1446 = vsel %vm1432, %v1423, 0.0
        %v1447 = vsel %vm1432, %v1427, 0.0
        %v1448 = vsel %vm1432, %v1431, 0.0
        %s1449 = scalar_lea.vmem %s3, 28
        %v1450 = vld [vmem:[%s1449] sm:$0xf]
        %v1452 = vsel %vm409, %v1450, 0
        %1454 = vmatprep.subr.mxu0 %v1445
        %1455 = vmatpush1.msra.mxu0 %v1433
        %1456 = vmatprep.subr.mxu0 %v1446
        %1457 = vmatpush1.msra.mxu0 %v1434
        %1458 = vmatprep.subr.mxu0 %v1447
        %1459 = vmatpush1.msra.mxu0 %v1435
        %1460 = vmatprep.subr.mxu0 %v1448
        %1461 = vmatpush1.msra.mxu0 %v1436
        %1462 = vmatprep.subr.mxu0 0.0
        %1463 = vmatpush1.msra.mxu0 0.0
        %1464 = vmatprep.subr.mxu0 0.0
        %1465 = vmatpush1.msra.mxu0 0.0
        %1466 = vmatprep.subr.mxu0 0.0
        %1467 = vmatpush1.msra.mxu0 0.0
        %1468 = vmatprep.subr.mxu0 0.0
        %1469 = vmatpush1.msra.mxu0 0.0
        %1470 = vmatprep.subr.mxu0 0.0
        %1471 = vmatpush1.msra.mxu0 0.0
        %1472 = vmatprep.subr.mxu0 0.0
        %1473 = vmatpush1.msra.mxu0 0.0
        %1474 = vmatprep.subr.mxu0 0.0
        %1475 = vmatpush1.msra.mxu0 0.0
        %1476 = vmatprep.subr.mxu0 0.0
        %1477 = vmatpush1.msra.mxu0 0.0
        %1478 = vmatprep.subr.mxu0 0.0
        %1479 = vmatpush1.msra.mxu0 0.0
        %1480 = vmatprep.subr.mxu0 0.0
        %1481 = vmatpush1.msra.mxu0 0.0
        %1482 = vmatprep.subr.mxu0 0.0
        %1483 = vmatpush1.msra.mxu0 0.0
        %1484 = vmatprep.subr.mxu0 0.0
        %1485 = vmatpush1.msra.mxu0 0.0
        %1486 = vmatprep.subr.mxu0 0.0
        %1487 = vmatpush1.msra.mxu0 0.0
        %1488 = vmatprep.subr.mxu0 0.0
        %1489 = vmatpush1.msra.mxu0 0.0
        %1490 = vmatprep.subr.mxu0 0.0
        %1491 = vmatpush1.msra.mxu0 0.0
        %1492 = vmatprep.subr.mxu0 0.0
        %1493 = vmatpush1.msra.mxu0 0.0
        %1494 = vmatprep.subr.mxu0 0.0
        %1495 = vmatpush1.msra.mxu0 0.0
        %1496 = vmatprep.subr.mxu0 0.0
        %1497 = vmatpush1.msra.mxu0 0.0
        %1498 = vmatprep.subr.mxu0 0.0
        %1499 = vmatpush1.msra.mxu0 0.0
        %1500 = vmatprep.subr.mxu0 0.0
        %1501 = vmatpush1.msra.mxu0 0.0
        %1502 = vmatprep.subr.mxu0 0.0
        %1503 = vmatpush1.msra.mxu0 0.0
        %1504 = vmatprep.subr.mxu0 0.0
        %1505 = vmatpush1.msra.mxu0 0.0
        %1506 = vmatprep.subr.mxu0 0.0
        %1507 = vmatpush1.msra.mxu0 0.0
        %1508 = vmatprep.subr.mxu0 0.0
        %1509 = vmatpush1.msra.mxu0 0.0
        %1510 = vmatprep.subr.mxu0 0.0
        %1511 = vmatpush1.msra.mxu0 0.0
        %1512 = vmatprep.subr.mxu0 0.0
        %1513 = vmatpush1.msra.mxu0 0.0
        %1514 = vmatprep.subr.mxu0 0.0
        %1515 = vmatpush1.msra.mxu0 0.0
        %1516 = vmatprep.subr.mxu0 0.0
        %1517 = vmatpush1.msra.mxu0 0.0
        %1518 = vmatprep.mubr.f32.mxu0 0.0
        %1519 = vmatmul.mubr.f32.gmra.mrb[0].mxu0 %v1452
        %v1520 = vpop.f32.mrb[0].mxu0
        %v1521 = vadd.f32 0.0, %v1520
        %v1522 = vpop.f32.mrb[0].mxu0
        %v1523 = vadd.f32 0.0, %v1522
        %1524 = vdwg.mxu0
        %v1525 = vadd.f32 %v1414, %v1521
        %v1526 = vadd.f32 %v1415, %v1523
        %1527 = vrot.lane.b32.xlu0 %v357, 111
        %v1528 = vpop.permute.xlu0 %1527
        %1529 = vrot.lane.b32.xlu0 %v358, 111
        %v1530 = vpop.permute.xlu0 %1529
        %1531 = vrot.lane.b32.xlu0 %v359, 111
        %v1532 = vpop.permute.xlu0 %1531
        %1533 = vrot.lane.b32.xlu0 %v360, 111
        %v1534 = vpop.permute.xlu0 %1533
        %1535 = vrot.lane.b32.xlu0 %v361, 111
        %v1536 = vpop.permute.xlu0 %1535
        %1537 = vrot.lane.b32.xlu0 %v362, 111
        %v1538 = vpop.permute.xlu0 %1537
        %1539 = vrot.lane.b32.xlu0 %v363, 111
        %v1540 = vpop.permute.xlu0 %1539
        %1541 = vrot.lane.b32.xlu0 %v364, 111
        %v1542 = vpop.permute.xlu0 %1541
        %vm1543 = vcmask 908288
        %v1544 = vsel %vm1543, %v1528, %v1530
        %v1545 = vsel %vm1543, %v1532, %v1534
        %v1546 = vsel %vm1543, %v1536, %v1538
        %v1547 = vsel %vm1543, %v1540, %v1542
        %v1556 = vsel %vm1543, %v1530, 0.0
        %v1557 = vsel %vm1543, %v1534, 0.0
        %v1558 = vsel %vm1543, %v1538, 0.0
        %v1559 = vsel %vm1543, %v1542, 0.0
        %v1560 = vmul.f32 %v1544, %v954
        %v1561 = vmul.f32 %v1556, %v958
        %v1562 = vmul.f32 %v1545, %v954
        %v1563 = vmul.f32 %v1557, %v958
        %v1564 = vmul.f32 %v1546, %v954
        %v1565 = vmul.f32 %v1558, %v958
        %v1566 = vmul.f32 %v1547, %v954
        %v1567 = vmul.f32 %v1559, %v958
        %s1568 = scalar_lea.vmem %s3, 32
        %v1569 = vld [vmem:[%s1568] sm:$0xf]
        %v1571 = vsel %vm409, %v1569, 0
        %1573 = vmatprep.subr.mxu0 %v1561
        %1574 = vmatpush1.msra.mxu0 %v1560
        %1575 = vmatprep.subr.mxu0 %v1563
        %1576 = vmatpush1.msra.mxu0 %v1562
        %1577 = vmatprep.subr.mxu0 %v1565
        %1578 = vmatpush1.msra.mxu0 %v1564
        %1579 = vmatprep.subr.mxu0 %v1567
        %1580 = vmatpush1.msra.mxu0 %v1566
        %1581 = vmatprep.subr.mxu0 0.0
        %1582 = vmatpush1.msra.mxu0 0.0
        %1583 = vmatprep.subr.mxu0 0.0
        %1584 = vmatpush1.msra.mxu0 0.0
        %1585 = vmatprep.subr.mxu0 0.0
        %1586 = vmatpush1.msra.mxu0 0.0
        %1587 = vmatprep.subr.mxu0 0.0
        %1588 = vmatpush1.msra.mxu0 0.0
        %1589 = vmatprep.subr.mxu0 0.0
        %1590 = vmatpush1.msra.mxu0 0.0
        %1591 = vmatprep.subr.mxu0 0.0
        %1592 = vmatpush1.msra.mxu0 0.0
        %1593 = vmatprep.subr.mxu0 0.0
        %1594 = vmatpush1.msra.mxu0 0.0
        %1595 = vmatprep.subr.mxu0 0.0
        %1596 = vmatpush1.msra.mxu0 0.0
        %1597 = vmatprep.subr.mxu0 0.0
        %1598 = vmatpush1.msra.mxu0 0.0
        %1599 = vmatprep.subr.mxu0 0.0
        %1600 = vmatpush1.msra.mxu0 0.0
        %1601 = vmatprep.subr.mxu0 0.0
        %1602 = vmatpush1.msra.mxu0 0.0
        %1603 = vmatprep.subr.mxu0 0.0
        %1604 = vmatpush1.msra.mxu0 0.0
        %1605 = vmatprep.subr.mxu0 0.0
        %1606 = vmatpush1.msra.mxu0 0.0
        %1607 = vmatprep.subr.mxu0 0.0
        %1608 = vmatpush1.msra.mxu0 0.0
        %1609 = vmatprep.subr.mxu0 0.0
        %1610 = vmatpush1.msra.mxu0 0.0
        %1611 = vmatprep.subr.mxu0 0.0
        %1612 = vmatpush1.msra.mxu0 0.0
        %1613 = vmatprep.subr.mxu0 0.0
        %1614 = vmatpush1.msra.mxu0 0.0
        %1615 = vmatprep.subr.mxu0 0.0
        %1616 = vmatpush1.msra.mxu0 0.0
        %1617 = vmatprep.subr.mxu0 0.0
        %1618 = vmatpush1.msra.mxu0 0.0
        %1619 = vmatprep.subr.mxu0 0.0
        %1620 = vmatpush1.msra.mxu0 0.0
        %1621 = vmatprep.subr.mxu0 0.0
        %1622 = vmatpush1.msra.mxu0 0.0
        %1623 = vmatprep.subr.mxu0 0.0
        %1624 = vmatpush1.msra.mxu0 0.0
        %1625 = vmatprep.subr.mxu0 0.0
        %1626 = vmatpush1.msra.mxu0 0.0
        %1627 = vmatprep.subr.mxu0 0.0
        %1628 = vmatpush1.msra.mxu0 0.0
        %1629 = vmatprep.subr.mxu0 0.0
        %1630 = vmatpush1.msra.mxu0 0.0
        %1631 = vmatprep.subr.mxu0 0.0
        %1632 = vmatpush1.msra.mxu0 0.0
        %1633 = vmatprep.subr.mxu0 0.0
        %1634 = vmatpush1.msra.mxu0 0.0
        %1635 = vmatprep.subr.mxu0 0.0
        %1636 = vmatpush1.msra.mxu0 0.0
        %1637 = vmatprep.mubr.f32.mxu0 0.0
        %1638 = vmatmul.mubr.f32.gmra.mrb[0].mxu0 %v1571
        %v1639 = vpop.f32.mrb[0].mxu0
        %v1640 = vadd.f32 0.0, %v1639
        %v1641 = vpop.f32.mrb[0].mxu0
        %v1642 = vadd.f32 0.0, %v1641
        %1643 = vdwg.mxu0
        %v1644 = vadd.f32 %v1525, %v1640
        %v1645 = vadd.f32 %v1526, %v1642
        %v1646 = vld [vmem:[%s4] sm:$0xf]
        %1648 = vset.pattern.permute.xlu0 0
        %1649 = vperm.xlu0 %1648, %v1646
        %v1650 = vpop.permute.xlu0 %1649
        %v1652 = vadd.f32 %v1644, %v1650
        %v1653 = vadd.f32 %v1645, %v1650
        %v1654 = vmax.f32 %v1652, 0.0
        %v1655 = vmax.f32 %v1653, 0.0
        %1656 = vmatprep.subr.mxu0 %v678
        %1657 = vmatpush1.xpose.msra.mxu0 %v677
        %1658 = vmatprep.subr.mxu0 0.0
        %1659 = vmatpush1.xpose.msra.mxu0 0.0
        %1660 = vmatprep.subr.mxu0 0.0
        %1661 = vmatpush1.xpose.msra.mxu0 0.0
        %1662 = vmatprep.subr.mxu0 0.0
        %1663 = vmatpush1.xpose.msra.mxu0 0.0
        %1664 = vmatprep.subr.mxu0 0.0
        %1665 = vmatpush1.xpose.msra.mxu0 0.0
        %1666 = vmatprep.subr.mxu0 0.0
        %1667 = vmatpush1.xpose.msra.mxu0 0.0
        %1668 = vmatprep.subr.mxu0 0.0
        %1669 = vmatpush1.xpose.msra.mxu0 0.0
        %1670 = vmatprep.subr.mxu0 0.0
        %1671 = vmatpush1.xpose.msra.mxu0 0.0
        %1672 = vmatprep.subr.mxu0 0.0
        %1673 = vmatpush1.xpose.msra.mxu0 0.0
        %1674 = vmatprep.subr.mxu0 0.0
        %1675 = vmatpush1.xpose.msra.mxu0 0.0
        %1676 = vmatprep.subr.mxu0 0.0
        %1677 = vmatpush1.xpose.msra.mxu0 0.0
        %1678 = vmatprep.subr.mxu0 0.0
        %1679 = vmatpush1.xpose.msra.mxu0 0.0
        %1680 = vmatprep.subr.mxu0 0.0
        %1681 = vmatpush1.xpose.msra.mxu0 0.0
        %1682 = vmatprep.subr.mxu0 0.0
        %1683 = vmatpush1.xpose.msra.mxu0 0.0
        %1684 = vmatprep.subr.mxu0 0.0
        %1685 = vmatpush1.xpose.msra.mxu0 0.0
        %1686 = vmatprep.subr.mxu0 0.0
        %1687 = vmatpush1.xpose.msra.mxu0 0.0
        %1688 = vmatprep.subr.mxu0 0.0
        %1689 = vmatpush1.xpose.msra.mxu0 0.0
        %1690 = vmatprep.subr.mxu0 0.0
        %1691 = vmatpush1.xpose.msra.mxu0 0.0
        %1692 = vmatprep.subr.mxu0 0.0
        %1693 = vmatpush1.xpose.msra.mxu0 0.0
        %1694 = vmatprep.subr.mxu0 0.0
        %1695 = vmatpush1.xpose.msra.mxu0 0.0
        %1696 = vmatprep.subr.mxu0 0.0
        %1697 = vmatpush1.xpose.msra.mxu0 0.0
        %1698 = vmatprep.subr.mxu0 0.0
        %1699 = vmatpush1.xpose.msra.mxu0 0.0
        %1700 = vmatprep.subr.mxu0 0.0
        %1701 = vmatpush1.xpose.msra.mxu0 0.0
        %1702 = vmatprep.subr.mxu0 0.0
        %1703 = vmatpush1.xpose.msra.mxu0 0.0
        %1704 = vmatprep.subr.mxu0 0.0
        %1705 = vmatpush1.xpose.msra.mxu0 0.0
        %1706 = vmatprep.subr.mxu0 0.0
        %1707 = vmatpush1.xpose.msra.mxu0 0.0
        %1708 = vmatprep.subr.mxu0 0.0
        %1709 = vmatpush1.xpose.msra.mxu0 0.0
        %1710 = vmatprep.subr.mxu0 0.0
        %1711 = vmatpush1.xpose.msra.mxu0 0.0
        %1712 = vmatprep.subr.mxu0 0.0
        %1713 = vmatpush1.xpose.msra.mxu0 0.0
        %1714 = vmatprep.subr.mxu0 0.0
        %1715 = vmatpush1.xpose.msra.mxu0 0.0
        %1716 = vmatprep.subr.mxu0 0.0
        %1717 = vmatpush1.xpose.msra.mxu0 0.0
        %1718 = vmatprep.subr.mxu0 0.0
        %1719 = vmatpush1.xpose.msra.mxu0 0.0
        %1720 = vmatprep.mubr.f32.mxu0 1.0
        %1721 = vmatmul.mubr.f32.gmra.mrb[0].mxu0 1.0
        %v1722 = vpop.f32.mrb[0].mxu0
        %v1723 = vadd.f32 0.0, %v1722
        %v1724 = vpop.f32.mrb[0].mxu0
        %1725 = vdwg.mxu0
        %v1726 = vmul.f32 %v1723, 0.00390625
        %1727 = vmatprep.subr.mxu0 %v1655
        %1728 = vmatpush1.xpose.msra.mxu0 %v1654
        %1729 = vmatprep.subr.mxu0 0.0
        %1730 = vmatpush1.xpose.msra.mxu0 0.0
        %1731 = vmatprep.subr.mxu0 0.0
        %1732 = vmatpush1.xpose.msra.mxu0 0.0
        %1733 = vmatprep.subr.mxu0 0.0
        %1734 = vmatpush1.xpose.msra.mxu0 0.0
        %1735 = vmatprep.subr.mxu0 0.0
        %1736 = vmatpush1.xpose.msra.mxu0 0.0
        %1737 = vmatprep.subr.mxu0 0.0
        %1738 = vmatpush1.xpose.msra.mxu0 0.0
        %1739 = vmatprep.subr.mxu0 0.0
        %1740 = vmatpush1.xpose.msra.mxu0 0.0
        %1741 = vmatprep.subr.mxu0 0.0
        %1742 = vmatpush1.xpose.msra.mxu0 0.0
        %1743 = vmatprep.subr.mxu0 0.0
        %1744 = vmatpush1.xpose.msra.mxu0 0.0
        %1745 = vmatprep.subr.mxu0 0.0
        %1746 = vmatpush1.xpose.msra.mxu0 0.0
        %1747 = vmatprep.subr.mxu0 0.0
        %1748 = vmatpush1.xpose.msra.mxu0 0.0
        %1749 = vmatprep.subr.mxu0 0.0
        %1750 = vmatpush1.xpose.msra.mxu0 0.0
        %1751 = vmatprep.subr.mxu0 0.0
        %1752 = vmatpush1.xpose.msra.mxu0 0.0
        %1753 = vmatprep.subr.mxu0 0.0
        %1754 = vmatpush1.xpose.msra.mxu0 0.0
        %1755 = vmatprep.subr.mxu0 0.0
        %1756 = vmatpush1.xpose.msra.mxu0 0.0
        %1757 = vmatprep.subr.mxu0 0.0
        %1758 = vmatpush1.xpose.msra.mxu0 0.0
        %1759 = vmatprep.subr.mxu0 0.0
        %1760 = vmatpush1.xpose.msra.mxu0 0.0
        %1761 = vmatprep.subr.mxu0 0.0
        %1762 = vmatpush1.xpose.msra.mxu0 0.0
        %1763 = vmatprep.subr.mxu0 0.0
        %1764 = vmatpush1.xpose.msra.mxu0 0.0
        %1765 = vmatprep.subr.mxu0 0.0
        %1766 = vmatpush1.xpose.msra.mxu0 0.0
        %1767 = vmatprep.subr.mxu0 0.0
        %1768 = vmatpush1.xpose.msra.mxu0 0.0
        %1769 = vmatprep.subr.mxu0 0.0
        %1770 = vmatpush1.xpose.msra.mxu0 0.0
        %1771 = vmatprep.subr.mxu0 0.0
        %1772 = vmatpush1.xpose.msra.mxu0 0.0
        %1773 = vmatprep.subr.mxu0 0.0
        %1774 = vmatpush1.xpose.msra.mxu0 0.0
        %1775 = vmatprep.subr.mxu0 0.0
        %1776 = vmatpush1.xpose.msra.mxu0 0.0
        %1777 = vmatprep.subr.mxu0 0.0
        %1778 = vmatpush1.xpose.msra.mxu0 0.0
        %1779 = vmatprep.subr.mxu0 0.0
        %1780 = vmatpush1.xpose.msra.mxu0 0.0
        %1781 = vmatprep.subr.mxu0 0.0
        %1782 = vmatpush1.xpose.msra.mxu0 0.0
        %1783 = vmatprep.subr.mxu0 0.0
        %1784 = vmatpush1.xpose.msra.mxu0 0.0
        %1785 = vmatprep.subr.mxu0 0.0
        %1786 = vmatpush1.xpose.msra.mxu0 0.0
        %1787 = vmatprep.subr.mxu0 0.0
        %1788 = vmatpush1.xpose.msra.mxu0 0.0
        %1789 = vmatprep.subr.mxu0 0.0
        %1790 = vmatpush1.xpose.msra.mxu0 0.0
        %1791 = vmatprep.mubr.f32.mxu0 1.0
        %1792 = vmatmul.mubr.f32.gmra.mrb[0].mxu0 1.0
        %v1793 = vpop.f32.mrb[0].mxu0
        %v1794 = vadd.f32 0.0, %v1793
        %v1795 = vpop.f32.mrb[0].mxu0
        %1796 = vdwg.mxu0
        %v1797 = vmul.f32 %v1794, 0.00390625
        %v1798 = vld [vmem:[%s7] sm:$0xf]
        %v1799 = vld [vmem:[%s8] sm:$0xf]
        %vm1800 = vcmask 31744
        %v1802 = vsel %vm1800, %v1797, 0
        %vm1804 = vcmask 1043456
        %v1806 = vsel %vm1804, %v1799, 0
        %1808 = vmatprep.subr.mxu0 0.0
        %1809 = vmatpush1.msra.mxu0 %v1806
        %1810 = vmatprep.subr.mxu0 0.0
        %1811 = vmatpush1.msra.mxu0 0.0
        %1812 = vmatprep.subr.mxu0 0.0
        %1813 = vmatpush1.msra.mxu0 0.0
        %1814 = vmatprep.subr.mxu0 0.0
        %1815 = vmatpush1.msra.mxu0 0.0
        %1816 = vmatprep.subr.mxu0 0.0
        %1817 = vmatpush1.msra.mxu0 0.0
        %1818 = vmatprep.subr.mxu0 0.0
        %1819 = vmatpush1.msra.mxu0 0.0
        %1820 = vmatprep.subr.mxu0 0.0
        %1821 = vmatpush1.msra.mxu0 0.0
        %1822 = vmatprep.subr.mxu0 0.0
        %1823 = vmatpush1.msra.mxu0 0.0
        %1824 = vmatprep.subr.mxu0 0.0
        %1825 = vmatpush1.msra.mxu0 0.0
        %1826 = vmatprep.subr.mxu0 0.0
        %1827 = vmatpush1.msra.mxu0 0.0
        %1828 = vmatprep.subr.mxu0 0.0
        %1829 = vmatpush1.msra.mxu0 0.0
        %1830 = vmatprep.subr.mxu0 0.0
        %1831 = vmatpush1.msra.mxu0 0.0
        %1832 = vmatprep.subr.mxu0 0.0
        %1833 = vmatpush1.msra.mxu0 0.0
        %1834 = vmatprep.subr.mxu0 0.0
        %1835 = vmatpush1.msra.mxu0 0.0
        %1836 = vmatprep.subr.mxu0 0.0
        %1837 = vmatpush1.msra.mxu0 0.0
        %1838 = vmatprep.subr.mxu0 0.0
        %1839 = vmatpush1.msra.mxu0 0.0
        %1840 = vmatprep.subr.mxu0 0.0
        %1841 = vmatpush1.msra.mxu0 0.0
        %1842 = vmatprep.subr.mxu0 0.0
        %1843 = vmatpush1.msra.mxu0 0.0
        %1844 = vmatprep.subr.mxu0 0.0
        %1845 = vmatpush1.msra.mxu0 0.0
        %1846 = vmatprep.subr.mxu0 0.0
        %1847 = vmatpush1.msra.mxu0 0.0
        %1848 = vmatprep.subr.mxu0 0.0
        %1849 = vmatpush1.msra.mxu0 0.0
        %1850 = vmatprep.subr.mxu0 0.0
        %1851 = vmatpush1.msra.mxu0 0.0
        %1852 = vmatprep.subr.mxu0 0.0
        %1853 = vmatpush1.msra.mxu0 0.0
        %1854 = vmatprep.subr.mxu0 0.0
        %1855 = vmatpush1.msra.mxu0 0.0
        %1856 = vmatprep.subr.mxu0 0.0
        %1857 = vmatpush1.msra.mxu0 0.0
        %1858 = vmatprep.subr.mxu0 0.0
        %1859 = vmatpush1.msra.mxu0 0.0
        %1860 = vmatprep.subr.mxu0 0.0
        %1861 = vmatpush1.msra.mxu0 0.0
        %1862 = vmatprep.subr.mxu0 0.0
        %1863 = vmatpush1.msra.mxu0 0.0
        %1864 = vmatprep.subr.mxu0 0.0
        %1865 = vmatpush1.msra.mxu0 0.0
        %1866 = vmatprep.subr.mxu0 0.0
        %1867 = vmatpush1.msra.mxu0 0.0
        %1868 = vmatprep.subr.mxu0 0.0
        %1869 = vmatpush1.msra.mxu0 0.0
        %1870 = vmatprep.subr.mxu0 0.0
        %1871 = vmatpush1.msra.mxu0 0.0
        %1872 = vmatprep.mubr.f32.mxu0 0.0
        %1873 = vmatmul.mubr.f32.gmra.mrb[0].mxu0 %v1802
        %v1874 = vpop.f32.mrb[0].mxu0
        %v1875 = vadd.f32 0.0, %v1874
        %v1876 = vpop.f32.mrb[0].mxu0
        %1877 = vdwg.mxu0
        %v1879 = vsel %vm1800, %v1726, 0
        %v1882 = vsel %vm1804, %v1798, 0
        %1884 = vmatprep.subr.mxu0 0.0
        %1885 = vmatpush1.msra.mxu0 %v1882
        %1886 = vmatprep.subr.mxu0 0.0
        %1887 = vmatpush1.msra.mxu0 0.0
        %1888 = vmatprep.subr.mxu0 0.0
        %1889 = vmatpush1.msra.mxu0 0.0
        %1890 = vmatprep.subr.mxu0 0.0
        %1891 = vmatpush1.msra.mxu0 0.0
        %1892 = vmatprep.subr.mxu0 0.0
        %1893 = vmatpush1.msra.mxu0 0.0
        %1894 = vmatprep.subr.mxu0 0.0
        %1895 = vmatpush1.msra.mxu0 0.0
        %1896 = vmatprep.subr.mxu0 0.0
        %1897 = vmatpush1.msra.mxu0 0.0
        %1898 = vmatprep.subr.mxu0 0.0
        %1899 = vmatpush1.msra.mxu0 0.0
        %1900 = vmatprep.subr.mxu0 0.0
        %1901 = vmatpush1.msra.mxu0 0.0
        %1902 = vmatprep.subr.mxu0 0.0
        %1903 = vmatpush1.msra.mxu0 0.0
        %1904 = vmatprep.subr.mxu0 0.0
        %1905 = vmatpush1.msra.mxu0 0.0
        %1906 = vmatprep.subr.mxu0 0.0
        %1907 = vmatpush1.msra.mxu0 0.0
        %1908 = vmatprep.subr.mxu0 0.0
        %1909 = vmatpush1.msra.mxu0 0.0
        %1910 = vmatprep.subr.mxu0 0.0
        %1911 = vmatpush1.msra.mxu0 0.0
        %1912 = vmatprep.subr.mxu0 0.0
        %1913 = vmatpush1.msra.mxu0 0.0
        %1914 = vmatprep.subr.mxu0 0.0
        %1915 = vmatpush1.msra.mxu0 0.0
        %1916 = vmatprep.subr.mxu0 0.0
        %1917 = vmatpush1.msra.mxu0 0.0
        %1918 = vmatprep.subr.mxu0 0.0
        %1919 = vmatpush1.msra.mxu0 0.0
        %1920 = vmatprep.subr.mxu0 0.0
        %1921 = vmatpush1.msra.mxu0 0.0
        %1922 = vmatprep.subr.mxu0 0.0
        %1923 = vmatpush1.msra.mxu0 0.0
        %1924 = vmatprep.subr.mxu0 0.0
        %1925 = vmatpush1.msra.mxu0 0.0
        %1926 = vmatprep.subr.mxu0 0.0
        %1927 = vmatpush1.msra.mxu0 0.0
        %1928 = vmatprep.subr.mxu0 0.0
        %1929 = vmatpush1.msra.mxu0 0.0
        %1930 = vmatprep.subr.mxu0 0.0
        %1931 = vmatpush1.msra.mxu0 0.0
        %1932 = vmatprep.subr.mxu0 0.0
        %1933 = vmatpush1.msra.mxu0 0.0
        %1934 = vmatprep.subr.mxu0 0.0
        %1935 = vmatpush1.msra.mxu0 0.0
        %1936 = vmatprep.subr.mxu0 0.0
        %1937 = vmatpush1.msra.mxu0 0.0
        %1938 = vmatprep.subr.mxu0 0.0
        %1939 = vmatpush1.msra.mxu0 0.0
        %1940 = vmatprep.subr.mxu0 0.0
        %1941 = vmatpush1.msra.mxu0 0.0
        %1942 = vmatprep.subr.mxu0 0.0
        %1943 = vmatpush1.msra.mxu0 0.0
        %1944 = vmatprep.subr.mxu0 0.0
        %1945 = vmatpush1.msra.mxu0 0.0
        %1946 = vmatprep.subr.mxu0 0.0
        %1947 = vmatpush1.msra.mxu0 0.0
        %1948 = vmatprep.mubr.f32.mxu0 0.0
        %1949 = vmatmul.mubr.f32.gmra.mrb[0].mxu0 %v1879
        %v1950 = vpop.f32.mrb[0].mxu0
        %v1951 = vadd.f32 %v1875, %v1950
        %v1952 = vpop.f32.mrb[0].mxu0
        %1953 = vdwg.mxu0
        %v1954 = vld [vmem:[%s9] sm:$0x1]
        %v1955 = vadd.f32 %v1951, %v1954
        %vm1956 = vcmask 16384
        %v1957 = vsel %vm1956, %v1955, -inf
        %1958 = vmax.xlane.f32.xlu0 %v1957
        %v1959 = vpop.xlane.xlu0 %1958
        %v1960 = vsub.f32 %v1955, %v1959
        %v1961 = vmul.f32 %v1960, 1.442695
        %v1962 = vpow.pop %v1961
        %v1963 = vsel %vm1956, %v1962, 0.0
        %1964 = vadd.xlane.f32.xlu0 %v1963
        %v1965 = vpop.xlane.xlu0 %1964
        %v1966 = vrcp.pop %v1965
        %v1967 = vmul.f32 %v1962, %v1966
        %1968 = vst.msk [vmem:[%s351] sm:$0x1] %vm1956, %v1967
        %s1969 = sand.u32 %s247, 1
        %s1970 = scalar_lea.sflag [#allocation3], %s1969
        %s1971 = sand.u32 %s247, 1
        %s1972 = scalar_lea.vmem [#allocation2], %s1971
        // Predicated region
        $region61: #{lightweight_hybrid_gate_forward.1} parent=59 // pred_check
          %p1973 = pneg %p257
        $region62: #{lightweight_hybrid_gate_forward.1} parent=59 // pred_check_branch
          %1975 = sbr.rel (%p1973) target = $region64
        $region63: #{lightweight_hybrid_gate_forward.1} parent=59 // pred_region
          %s1977 = ssub.s32 16, 16
          %1978 = vsyncadd %s1970, %s1977
          %s1979 = smul.addr %s24, 16
          %s1980 = scalar_lea.hbm %s10, %s1979
          %s1982 = sshll.u32 %s1972, 4
          %s1983 = int_to_ptr.vmem [resolvable:$true] %s1982
          %1985 = dma.vmem_to_hbm [thread:$0]  %s1983, 16, %s1980, %s1970
        $region64: #{lightweight_hybrid_gate_forward.1} parent=59 // pred_fallthru
          _
      $region60: #{lightweight_hybrid_gate_forward.1} parent=5 // pred_fallthru
        _
      %p1986 = scmp.le.s32.totalorder 2, %s19
      // Predicated region
      $region65: #{lightweight_hybrid_gate_forward.1} parent=5 // pred_check
        %p1987 = pneg %p1986
      $region66: #{lightweight_hybrid_gate_forward.1} parent=5 // pred_check_branch
        %1989 = sbr.rel (%p1987) target = $region68
      $region67: #{lightweight_hybrid_gate_forward.1} parent=5 // pred_region
        %s1990 = ssub.s32 %s19, 2
        // Predicated region
        $region69: #{lightweight_hybrid_gate_forward.1} parent=67 // pred_check
          %p1991 = pneg %p263
        $region70: #{lightweight_hybrid_gate_forward.1} parent=67 // pred_check_branch
          %1993 = sbr.rel (%p1991) target = $region72
        $region71: #{lightweight_hybrid_gate_forward.1} parent=67 // pred_region
          %s1994 = sand.u32 %s248, 1
          %s1995 = scalar_lea.sflag [#allocation3], %s1994
          %s1996 = sand.u32 %s248, 1
          %s1997 = scalar_lea.vmem [#allocation2], %s1996
          %1998 = dma.done %s1995, 16
        $region72: #{lightweight_hybrid_gate_forward.1} parent=67 // pred_fallthru
          _
      $region68: #{lightweight_hybrid_gate_forward.1} parent=5 // pred_fallthru
        _
    $region6: #{lightweight_hybrid_gate_forward.1} parent=1 // loop_footer
      %s23 = sadd.s32 1, %s19
    $region7: #{lightweight_hybrid_gate_forward.1} parent=1 // loop_footer_branch
      %18 = sbr.rel target = $region3
    $region8: #{lightweight_hybrid_gate_forward.1} parent=1 // loop_exit
      _
    %1999 = vsyncpa [#allocation3], 1
    %s2000 = scalar_lea.sflag [#allocation3], 1
    %2001 = vsyncpa %s2000, 1

</llo_original>
